<compile_context>
chip_gen: v6e
topology: v6e:2x2x1
jax: 0.10.0
libtpu: 0.0.40
codegen_flags: <defaults>
</compile_context>

<pallas_src>
import functools

import numpy as np
import jax
import jax.numpy as jnp
from jax.experimental import pallas as pl
from jax.experimental.pallas import tpu as pltpu


def _vde_kernel(m_ref, wf_ref, we_ref, uv_ref, feats_ref, out_ref,
                *, L, C, C_out):
    """Per (pixel-tile, view) program.

    m_ref:     (N*9,)          SMEM f32; per view [a_u,a_v,a_c, b_u,b_v,b_c,
               c_u,c_v,c_c] — rows of inv(proj) with the camera position and
               the two homogeneous columns folded into the constants.
    wf_ref:    (C_out*C,)      SMEM f32; feats part of the 1x1 conv weight.
    we_ref:    (C_out*(3+6L),) SMEM f32; view-encoding part of the weight.
    uv_ref:    (2, S, 128)     VMEM f32; sublane-dense (u, v) pixel coords.
    feats_ref: (C, S, 128)     VMEM; this view's feature tile.
    out_ref:   (C_out, S, 128) VMEM.
    """
    n = pl.program_id(1)                  # inner grid axis = view index
    enc_dim = 3 + 6 * L
    S = uv_ref.shape[1]

    base = n * 9
    a_u = m_ref[base + 0]; a_v = m_ref[base + 1]; a_c = m_ref[base + 2]
    b_u = m_ref[base + 3]; b_v = m_ref[base + 4]; b_c = m_ref[base + 5]
    c_u = m_ref[base + 6]; c_v = m_ref[base + 7]; c_c = m_ref[base + 8]

    pi = np.float32(np.pi)

    # Process the tile in 8-sublane chunks: every per-pixel quantity is a dense
    # (<=8, 128) f32 vreg, the positional encoding never round-trips through
    # VMEM, and outputs are written as full-vreg stores.  All slices are
    # static, so nothing here needs dynamic indexing.
    for j0 in range(0, S, 8):
        c8 = min(8, S - j0)
        uu = uv_ref[0, pl.ds(j0, c8), :]
        vv = uv_ref[1, pl.ds(j0, c8), :]

        # View vector: scalar-broadcast FMAs on the VPU (no MXU, no XLU).
        vx = a_u * uu + a_v * vv + a_c
        vy = b_u * uu + b_v * vv + b_c
        vz = c_u * uu + c_v * vv + c_c

        # Normalize (EUP rsqrt).  NOTE: like the PyTorch module, a zero-length
        # view vector produces Inf/NaN here; semantics kept identical.
        inv_norm = jax.lax.rsqrt(vx * vx + vy * vy + vz * vz)
        nx = vx * inv_norm
        ny = vy * inv_norm
        nz = vz * inv_norm

        enc = [nx, ny, nz]
        if L > 0:
            # sin/cos only at the base frequency; higher bands use the
            # double-angle recurrence (6 instead of 6L transcendentals/pixel).
            # The recurrence compounds a tiny relative error per band; well
            # within tolerance for moderate L (<= 4).
            sx = jnp.sin(nx * pi); cx = jnp.cos(nx * pi)
            sy = jnp.sin(ny * pi); cy = jnp.cos(ny * pi)
            sz = jnp.sin(nz * pi); cz = jnp.cos(nz * pi)
            for i in range(L):
                enc.extend((sx, sy, sz, cx, cy, cz))
                if i + 1 < L:
                    sx, cx = 2.0 * sx * cx, 1.0 - 2.0 * (sx * sx)
                    sy, cy = 2.0 * sy * cy, 1.0 - 2.0 * (sy * sy)
                    sz, cz = 2.0 * sz * cz, 1.0 - 2.0 * (sz * sz)

        # Keep elementwise math in f32 (v5e has no bf16 VPU/EUP); only the
        # final store casts back to the activation dtype.
        f = [feats_ref[c, pl.ds(j0, c8), :].astype(jnp.float32)
             for c in range(C)]

        # 1x1 conv as scalar-broadcast FMA accumulation with weights in SMEM.
        # At these channel counts this beats staging an encoding slab for the
        # MXU (two tiny dots + extra add + masked scratch stores).
        # TODO(synk): for large C/C_out a single fused MXU dot over a staged
        # [feats; enc] slab would be preferable; not needed at these shapes.
        for o in range(C_out):
            acc = f[0] * wf_ref[o * C + 0]
            for c in range(1, C):
                acc = acc + f[c] * wf_ref[o * C + c]
            for k in range(enc_dim):
                acc = acc + enc[k] * we_ref[o * enc_dim + k]
            out_ref[o, pl.ds(j0, c8), :] = acc.astype(out_ref.dtype)


def _pick_sublane_tile(R, c_in, c_out, *, sublane_cap=128,
                       vmem_step_budget=6 * 1024 * 1024):
    """Sublane rows (of 128 px each) per grid step.

    Sized from a per-step VMEM budget (double-buffered feats + out + uv at
    f32) so per-step pipeline overhead (~0.35us) is amortized, then capped so
    the unrolled in-kernel 8-sublane chunk loop stays short.  The resulting
    footprint is far below even v7x's 64 MiB/TC VMEM, so the same choice is
    safe on v5e/v6e (128 MiB) and v7x (64 MiB).
    """
    bytes_per_sublane = 128 * 4 * (2 * (c_in + c_out) + 2 * 2)
    s_budget = max(8, vmem_step_budget // bytes_per_sublane)
    s_max = int(min(sublane_cap, s_budget))
    if R <= s_max:
        return R
    s = (s_max // 8) * 8
    while s >= 8:
        if R % s == 0:
            return s
        s -= 8
    return R  # no nice divisor: fall back to one block over the pixel axis


def view_direction_encoder(feats, proj, cam_positions, weight, L):
    """feats: (B*V, C, H, W), proj: (B, V, 4, 4), cam_positions: (B, V, 3),
    weight: (C_out, C + 3 + 6L) — squeezed Conv2d(.,.,1,bias=False) weight."""
    B, V = proj.shape[:2]
    N, C, H, W = feats.shape
    assert N == B * V
    HW = H * W
    assert HW % 128 == 0, "H*W must be a multiple of 128 for lane-dense tiling"
    dtype = feats.dtype

    enc_dim = 3 + 6 * L
    C_out, C_in = weight.shape
    assert C_in == C + enc_dim

    R = HW // 128                       # sublane rows of the flattened image
    S = _pick_sublane_tile(R, C, C_out)
    nT = R // S
    assert nT * S == R

    # Flat 1-D SMEM scalars (avoids the [ceil/8*8, 128]-word 2-D SMEM padding).
    wf_flat = weight[:, :C].astype(jnp.float32).reshape(-1)
    we_flat = weight[:, C:].astype(jnp.float32).reshape(-1)

    # Sublane-dense (u, v) pixel grid; with the view axis innermost in the
    # grid its block index is unchanged across views, so each tile is only
    # DMA'd once (not once per view).
    p = jnp.arange(HW, dtype=jnp.int32)
    uvgrid = jnp.stack(
        [(p % W).astype(jnp.float32), (p // W).astype(jnp.float32)],
        axis=0).reshape(2, R, 128)

    # TODO(synk): 4x4 matrix inverse has no clean Pallas equivalent; JAX glue.
    inv_proj = jnp.linalg.inv(proj)                   # (B, V, 4, 4)
    Mr = inv_proj[..., :3, :]                         # (B, V, 3, 4)
    # view_k = Mr[k,0]*u + Mr[k,1]*v + (Mr[k,2] + Mr[k,3]) - cam_k
    const = Mr[..., 2] + Mr[..., 3] - cam_positions   # (B, V, 3)
    M9 = jnp.stack([Mr[..., 0], Mr[..., 1], const], axis=-1)  # (B, V, 3, 3)
    M9 = M9.reshape(N * 9).astype(jnp.float32)

    feats_r = feats.reshape(N, C, R, 128)

    kernel = functools.partial(_vde_kernel, L=L, C=C, C_out=C_out)

    out = pl.pallas_call(
        kernel,
        out_shape=jax.ShapeDtypeStruct((N, C_out, R, 128), dtype),
        grid_spec=pltpu.PrefetchScalarGridSpec(
            num_scalar_prefetch=0,
            grid=(nT, N),   # outer: pixel tile, inner: view
            in_specs=[
                pl.BlockSpec(memory_space=pltpu.MemorySpace.SMEM),    # M9
                pl.BlockSpec(memory_space=pltpu.MemorySpace.SMEM),    # wf
                pl.BlockSpec(memory_space=pltpu.MemorySpace.SMEM),    # we
                pl.BlockSpec((2, S, 128), lambda t, n: (0, t, 0)),    # uv
                pl.BlockSpec((None, C, S, 128),
                             lambda t, n: (n, 0, t, 0)),              # feats
            ],
            out_specs=pl.BlockSpec((None, C_out, S, 128),
                                   lambda t, n: (n, 0, t, 0)),
        ),
        compiler_params=pltpu.CompilerParams(
            dimension_semantics=("parallel", "parallel"),
            # Well under the v7x 64 MiB/TC physical VMEM; fine on v5e/v6e too.
            vmem_limit_bytes=32 * 1024 * 1024,
        ),
    )(M9, wf_flat, we_flat, uvgrid, feats_r)

    return out.reshape(N, C_out, H, W)


def _reference(feats, proj, cam_positions, weight, L):
    """Pure-JAX transcription of the PyTorch forward, for verification."""
    N, C, H, W = feats.shape
    dtype = feats.dtype
    u = jnp.arange(W, dtype=dtype)
    v = jnp.arange(H, dtype=dtype)
    vv, uu = jnp.meshgrid(v, u, indexing="ij")
    ones = jnp.ones_like(uu)
    uv = jnp.stack((uu, vv, ones, ones), axis=0).reshape(4, -1)
    inv_proj = jnp.linalg.inv(proj)
    xyz = inv_proj @ uv                                  # (B, V, 4, HW)
    view = xyz[:, :, :3] - cam_positions[..., None]
    view = view / jnp.linalg.norm(view, axis=2, keepdims=True)
    enc = [view]
    for i in range(L):
        enc.append(jnp.sin(view * np.pi * 2 ** i))
        enc.append(jnp.cos(view * np.pi * 2 ** i))
    enc = jnp.concatenate(enc, axis=2)
    enc = enc.reshape(enc.shape[0] * enc.shape[1], enc.shape[2], H, W)
    x = jnp.concatenate([feats, enc.astype(dtype)], axis=1)
    return jnp.einsum("oc,nchw->nohw", weight, x)


if __name__ == "__main__":
    feat_depth, L = 4, 2
    B, V, H, W = 1, 2, 16, 16
    N = B * V
    view_embedding_dim = 3 + 6 * L
    C_in = feat_depth + view_embedding_dim

    key = jax.random.PRNGKey(0)
    k1, k2, k3, k4 = jax.random.split(key, 4)

    feats = jax.random.normal(k1, (N, feat_depth, H, W), jnp.float32)
    proj = (jnp.eye(4, dtype=jnp.float32)[None, None]
            + 0.1 * jax.random.normal(k2, (B, V, 4, 4), jnp.float32))
    cam_positions = (0.1 * jax.random.normal(k3, (B, V, 3), jnp.float32)
                     + jnp.array([0.0, 0.0, 5.0], jnp.float32))

    # deterministic xavier_normal_ equivalent for the 1x1 conv weight
    std = float(np.sqrt(2.0 / (C_in + feat_depth)))
    weight = std * jax.random.normal(k4, (feat_depth, C_in), jnp.float32)

    out = view_direction_encoder(feats, proj, cam_positions, weight, L)
    out = jax.block_until_ready(out)

    ref = _reference(feats, proj, cam_positions, weight, L)
    assert out.shape == (N, feat_depth, H, W), out.shape
    if not jnp.allclose(out, ref, atol=5e-2, rtol=5e-2):
        raise AssertionError("Pallas kernel output does not match reference")

    print("KERNEL_OK")
</pallas_src>

<mosaic_0001>
module attributes {stable_mosaic.version = 11 : i64} {
  func.func @_vde_kernel(%arg0: i32, %arg1: i32, %arg2: memref<18xf32, #tpu.memory_space<smem>>, %arg3: memref<16xf32, #tpu.memory_space<smem>>, %arg4: memref<60xf32, #tpu.memory_space<smem>>, %arg5: memref<2x2x128xf32, #tpu.memory_space<vmem>>, %arg6: memref<1x4x2x128xf32, #tpu.memory_space<vmem>>, %arg7: memref<1x4x2x128xf32, #tpu.memory_space<vmem>>) attributes {dimension_semantics = [#tpu.dimension_semantics<parallel>, #tpu.dimension_semantics<parallel>], iteration_bounds = array<i64: 1, 2>, scalar_prefetch = 0 : i64, scratch_operands = 0 : i64, tpu.core_type = #tpu.core_type<tc>, window_params = [{transform_indices = @transform_0, window_bounds = array<i64: 18>}, {transform_indices = @transform_1, window_bounds = array<i64: 16>}, {transform_indices = @transform_2, window_bounds = array<i64: 60>}, {transform_indices = @transform_3, window_bounds = array<i64: 2, 2, 128>}, {transform_indices = @transform_4, window_bounds = array<i64: 1, 4, 2, 128>}, {transform_indices = @transform_5, window_bounds = array<i64: 1, 4, 2, 128>}]} {
    %c9_i32 = arith.constant 9 : i32
    %0 = arith.muli %arg1, %c9_i32 : i32
    %c0_i32 = arith.constant 0 : i32
    %1 = arith.addi %0, %c0_i32 : i32
    %2 = arith.index_cast %1 : i32 to index
    %3 = memref.load %arg2[%2] : memref<18xf32, #tpu.memory_space<smem>>
    %c1_i32 = arith.constant 1 : i32
    %4 = arith.addi %0, %c1_i32 : i32
    %5 = arith.index_cast %4 : i32 to index
    %6 = memref.load %arg2[%5] : memref<18xf32, #tpu.memory_space<smem>>
    %c2_i32 = arith.constant 2 : i32
    %7 = arith.addi %0, %c2_i32 : i32
    %8 = arith.index_cast %7 : i32 to index
    %9 = memref.load %arg2[%8] : memref<18xf32, #tpu.memory_space<smem>>
    %c3_i32 = arith.constant 3 : i32
    %10 = arith.addi %0, %c3_i32 : i32
    %11 = arith.index_cast %10 : i32 to index
    %12 = memref.load %arg2[%11] : memref<18xf32, #tpu.memory_space<smem>>
    %c4_i32 = arith.constant 4 : i32
    %13 = arith.addi %0, %c4_i32 : i32
    %14 = arith.index_cast %13 : i32 to index
    %15 = memref.load %arg2[%14] : memref<18xf32, #tpu.memory_space<smem>>
    %c5_i32 = arith.constant 5 : i32
    %16 = arith.addi %0, %c5_i32 : i32
    %17 = arith.index_cast %16 : i32 to index
    %18 = memref.load %arg2[%17] : memref<18xf32, #tpu.memory_space<smem>>
    %c6_i32 = arith.constant 6 : i32
    %19 = arith.addi %0, %c6_i32 : i32
    %20 = arith.index_cast %19 : i32 to index
    %21 = memref.load %arg2[%20] : memref<18xf32, #tpu.memory_space<smem>>
    %c7_i32 = arith.constant 7 : i32
    %22 = arith.addi %0, %c7_i32 : i32
    %23 = arith.index_cast %22 : i32 to index
    %24 = memref.load %arg2[%23] : memref<18xf32, #tpu.memory_space<smem>>
    %c8_i32 = arith.constant 8 : i32
    %25 = arith.addi %0, %c8_i32 : i32
    %26 = arith.index_cast %25 : i32 to index
    %27 = memref.load %arg2[%26] : memref<18xf32, #tpu.memory_space<smem>>
    %c0 = arith.constant 0 : index
    %c0_0 = arith.constant 0 : index
    %c0_1 = arith.constant 0 : index
    %28 = vector.load %arg5[%c0, %c0_0, %c0_1] : memref<2x2x128xf32, #tpu.memory_space<vmem>>, vector<1x2x128xf32>
    %29 = vector.shape_cast %28 : vector<1x2x128xf32> to vector<2x128xf32>
    %c1 = arith.constant 1 : index
    %c0_2 = arith.constant 0 : index
    %c0_3 = arith.constant 0 : index
    %30 = vector.load %arg5[%c1, %c0_2, %c0_3] : memref<2x2x128xf32, #tpu.memory_space<vmem>>, vector<1x2x128xf32>
    %31 = vector.shape_cast %30 : vector<1x2x128xf32> to vector<2x128xf32>
    %32 = vector.broadcast %3 : f32 to vector<2x128xf32>
    %33 = arith.mulf %32, %29 : vector<2x128xf32>
    %34 = vector.broadcast %6 : f32 to vector<2x128xf32>
    %35 = arith.mulf %34, %31 : vector<2x128xf32>
    %36 = arith.addf %33, %35 : vector<2x128xf32>
    %37 = vector.broadcast %9 : f32 to vector<2x128xf32>
    %38 = arith.addf %36, %37 : vector<2x128xf32>
    %39 = vector.broadcast %12 : f32 to vector<2x128xf32>
    %40 = arith.mulf %39, %29 : vector<2x128xf32>
    %41 = vector.broadcast %15 : f32 to vector<2x128xf32>
    %42 = arith.mulf %41, %31 : vector<2x128xf32>
    %43 = arith.addf %40, %42 : vector<2x128xf32>
    %44 = vector.broadcast %18 : f32 to vector<2x128xf32>
    %45 = arith.addf %43, %44 : vector<2x128xf32>
    %46 = vector.broadcast %21 : f32 to vector<2x128xf32>
    %47 = arith.mulf %46, %29 : vector<2x128xf32>
    %48 = vector.broadcast %24 : f32 to vector<2x128xf32>
    %49 = arith.mulf %48, %31 : vector<2x128xf32>
    %50 = arith.addf %47, %49 : vector<2x128xf32>
    %51 = vector.broadcast %27 : f32 to vector<2x128xf32>
    %52 = arith.addf %50, %51 : vector<2x128xf32>
    %53 = arith.mulf %38, %38 : vector<2x128xf32>
    %54 = arith.mulf %45, %45 : vector<2x128xf32>
    %55 = arith.addf %53, %54 : vector<2x128xf32>
    %56 = arith.mulf %52, %52 : vector<2x128xf32>
    %57 = arith.addf %55, %56 : vector<2x128xf32>
    %58 = math.rsqrt %57 : vector<2x128xf32>
    %59 = arith.mulf %38, %58 : vector<2x128xf32>
    %60 = arith.mulf %45, %58 : vector<2x128xf32>
    %61 = arith.mulf %52, %58 : vector<2x128xf32>
    %cst = arith.constant 3.14159274 : f32
    %62 = vector.broadcast %cst : f32 to vector<2x128xf32>
    %63 = arith.mulf %59, %62 : vector<2x128xf32>
    %64 = math.sin %63 : vector<2x128xf32>
    %cst_4 = arith.constant 3.14159274 : f32
    %65 = vector.broadcast %cst_4 : f32 to vector<2x128xf32>
    %66 = arith.mulf %59, %65 : vector<2x128xf32>
    %67 = math.cos %66 : vector<2x128xf32>
    %cst_5 = arith.constant 3.14159274 : f32
    %68 = vector.broadcast %cst_5 : f32 to vector<2x128xf32>
    %69 = arith.mulf %60, %68 : vector<2x128xf32>
    %70 = math.sin %69 : vector<2x128xf32>
    %cst_6 = arith.constant 3.14159274 : f32
    %71 = vector.broadcast %cst_6 : f32 to vector<2x128xf32>
    %72 = arith.mulf %60, %71 : vector<2x128xf32>
    %73 = math.cos %72 : vector<2x128xf32>
    %cst_7 = arith.constant 3.14159274 : f32
    %74 = vector.broadcast %cst_7 : f32 to vector<2x128xf32>
    %75 = arith.mulf %61, %74 : vector<2x128xf32>
    %76 = math.sin %75 : vector<2x128xf32>
    %cst_8 = arith.constant 3.14159274 : f32
    %77 = vector.broadcast %cst_8 : f32 to vector<2x128xf32>
    %78 = arith.mulf %61, %77 : vector<2x128xf32>
    %79 = math.cos %78 : vector<2x128xf32>
    %cst_9 = arith.constant 2.000000e+00 : f32
    %80 = vector.broadcast %cst_9 : f32 to vector<2x128xf32>
    %81 = arith.mulf %80, %64 : vector<2x128xf32>
    %82 = arith.mulf %81, %67 : vector<2x128xf32>
    %83 = arith.mulf %64, %64 : vector<2x128xf32>
    %cst_10 = arith.constant 2.000000e+00 : f32
    %84 = vector.broadcast %cst_10 : f32 to vector<2x128xf32>
    %85 = arith.mulf %84, %83 : vector<2x128xf32>
    %cst_11 = arith.constant 1.000000e+00 : f32
    %86 = vector.broadcast %cst_11 : f32 to vector<2x128xf32>
    %87 = arith.subf %86, %85 : vector<2x128xf32>
    %cst_12 = arith.constant 2.000000e+00 : f32
    %88 = vector.broadcast %cst_12 : f32 to vector<2x128xf32>
    %89 = arith.mulf %88, %70 : vector<2x128xf32>
    %90 = arith.mulf %89, %73 : vector<2x128xf32>
    %91 = arith.mulf %70, %70 : vector<2x128xf32>
    %cst_13 = arith.constant 2.000000e+00 : f32
    %92 = vector.broadcast %cst_13 : f32 to vector<2x128xf32>
    %93 = arith.mulf %92, %91 : vector<2x128xf32>
    %cst_14 = arith.constant 1.000000e+00 : f32
    %94 = vector.broadcast %cst_14 : f32 to vector<2x128xf32>
    %95 = arith.subf %94, %93 : vector<2x128xf32>
    %cst_15 = arith.constant 2.000000e+00 : f32
    %96 = vector.broadcast %cst_15 : f32 to vector<2x128xf32>
    %97 = arith.mulf %96, %76 : vector<2x128xf32>
    %98 = arith.mulf %97, %79 : vector<2x128xf32>
    %99 = arith.mulf %76, %76 : vector<2x128xf32>
    %cst_16 = arith.constant 2.000000e+00 : f32
    %100 = vector.broadcast %cst_16 : f32 to vector<2x128xf32>
    %101 = arith.mulf %100, %99 : vector<2x128xf32>
    %cst_17 = arith.constant 1.000000e+00 : f32
    %102 = vector.broadcast %cst_17 : f32 to vector<2x128xf32>
    %103 = arith.subf %102, %101 : vector<2x128xf32>
    %c0_18 = arith.constant 0 : index
    %c0_19 = arith.constant 0 : index
    %c0_20 = arith.constant 0 : index
    %c0_21 = arith.constant 0 : index
    %104 = vector.load %arg6[%c0_18, %c0_19, %c0_20, %c0_21] : memref<1x4x2x128xf32, #tpu.memory_space<vmem>>, vector<1x1x2x128xf32>
    %105 = vector.shape_cast %104 : vector<1x1x2x128xf32> to vector<2x128xf32>
    %c0_22 = arith.constant 0 : index
    %c1_23 = arith.constant 1 : index
    %c0_24 = arith.constant 0 : index
    %c0_25 = arith.constant 0 : index
    %106 = vector.load %arg6[%c0_22, %c1_23, %c0_24, %c0_25] : memref<1x4x2x128xf32, #tpu.memory_space<vmem>>, vector<1x1x2x128xf32>
    %107 = vector.shape_cast %106 : vector<1x1x2x128xf32> to vector<2x128xf32>
    %c0_26 = arith.constant 0 : index
    %c2 = arith.constant 2 : index
    %c0_27 = arith.constant 0 : index
    %c0_28 = arith.constant 0 : index
    %108 = vector.load %arg6[%c0_26, %c2, %c0_27, %c0_28] : memref<1x4x2x128xf32, #tpu.memory_space<vmem>>, vector<1x1x2x128xf32>
    %109 = vector.shape_cast %108 : vector<1x1x2x128xf32> to vector<2x128xf32>
    %c0_29 = arith.constant 0 : index
    %c3 = arith.constant 3 : index
    %c0_30 = arith.constant 0 : index
    %c0_31 = arith.constant 0 : index
    %110 = vector.load %arg6[%c0_29, %c3, %c0_30, %c0_31] : memref<1x4x2x128xf32, #tpu.memory_space<vmem>>, vector<1x1x2x128xf32>
    %111 = vector.shape_cast %110 : vector<1x1x2x128xf32> to vector<2x128xf32>
    %c0_32 = arith.constant 0 : index
    %112 = memref.load %arg3[%c0_32] : memref<16xf32, #tpu.memory_space<smem>>
    %113 = vector.broadcast %112 : f32 to vector<2x128xf32>
    %114 = arith.mulf %105, %113 : vector<2x128xf32>
    %c1_33 = arith.constant 1 : index
    %115 = memref.load %arg3[%c1_33] : memref<16xf32, #tpu.memory_space<smem>>
    %116 = vector.broadcast %115 : f32 to vector<2x128xf32>
    %117 = arith.mulf %107, %116 : vector<2x128xf32>
    %118 = arith.addf %114, %117 : vector<2x128xf32>
    %c2_34 = arith.constant 2 : index
    %119 = memref.load %arg3[%c2_34] : memref<16xf32, #tpu.memory_space<smem>>
    %120 = vector.broadcast %119 : f32 to vector<2x128xf32>
    %121 = arith.mulf %109, %120 : vector<2x128xf32>
    %122 = arith.addf %118, %121 : vector<2x128xf32>
    %c3_35 = arith.constant 3 : index
    %123 = memref.load %arg3[%c3_35] : memref<16xf32, #tpu.memory_space<smem>>
    %124 = vector.broadcast %123 : f32 to vector<2x128xf32>
    %125 = arith.mulf %111, %124 : vector<2x128xf32>
    %126 = arith.addf %122, %125 : vector<2x128xf32>
    %c0_36 = arith.constant 0 : index
    %127 = memref.load %arg4[%c0_36] : memref<60xf32, #tpu.memory_space<smem>>
    %128 = vector.broadcast %127 : f32 to vector<2x128xf32>
    %129 = arith.mulf %59, %128 : vector<2x128xf32>
    %130 = arith.addf %126, %129 : vector<2x128xf32>
    %c1_37 = arith.constant 1 : index
    %131 = memref.load %arg4[%c1_37] : memref<60xf32, #tpu.memory_space<smem>>
    %132 = vector.broadcast %131 : f32 to vector<2x128xf32>
    %133 = arith.mulf %60, %132 : vector<2x128xf32>
    %134 = arith.addf %130, %133 : vector<2x128xf32>
    %c2_38 = arith.constant 2 : index
    %135 = memref.load %arg4[%c2_38] : memref<60xf32, #tpu.memory_space<smem>>
    %136 = vector.broadcast %135 : f32 to vector<2x128xf32>
    %137 = arith.mulf %61, %136 : vector<2x128xf32>
    %138 = arith.addf %134, %137 : vector<2x128xf32>
    %c3_39 = arith.constant 3 : index
    %139 = memref.load %arg4[%c3_39] : memref<60xf32, #tpu.memory_space<smem>>
    %140 = vector.broadcast %139 : f32 to vector<2x128xf32>
    %141 = arith.mulf %64, %140 : vector<2x128xf32>
    %142 = arith.addf %138, %141 : vector<2x128xf32>
    %c4 = arith.constant 4 : index
    %143 = memref.load %arg4[%c4] : memref<60xf32, #tpu.memory_space<smem>>
    %144 = vector.broadcast %143 : f32 to vector<2x128xf32>
    %145 = arith.mulf %70, %144 : vector<2x128xf32>
    %146 = arith.addf %142, %145 : vector<2x128xf32>
    %c5 = arith.constant 5 : index
    %147 = memref.load %arg4[%c5] : memref<60xf32, #tpu.memory_space<smem>>
    %148 = vector.broadcast %147 : f32 to vector<2x128xf32>
    %149 = arith.mulf %76, %148 : vector<2x128xf32>
    %150 = arith.addf %146, %149 : vector<2x128xf32>
    %c6 = arith.constant 6 : index
    %151 = memref.load %arg4[%c6] : memref<60xf32, #tpu.memory_space<smem>>
    %152 = vector.broadcast %151 : f32 to vector<2x128xf32>
    %153 = arith.mulf %67, %152 : vector<2x128xf32>
    %154 = arith.addf %150, %153 : vector<2x128xf32>
    %c7 = arith.constant 7 : index
    %155 = memref.load %arg4[%c7] : memref<60xf32, #tpu.memory_space<smem>>
    %156 = vector.broadcast %155 : f32 to vector<2x128xf32>
    %157 = arith.mulf %73, %156 : vector<2x128xf32>
    %158 = arith.addf %154, %157 : vector<2x128xf32>
    %c8 = arith.constant 8 : index
    %159 = memref.load %arg4[%c8] : memref<60xf32, #tpu.memory_space<smem>>
    %160 = vector.broadcast %159 : f32 to vector<2x128xf32>
    %161 = arith.mulf %79, %160 : vector<2x128xf32>
    %162 = arith.addf %158, %161 : vector<2x128xf32>
    %c9 = arith.constant 9 : index
    %163 = memref.load %arg4[%c9] : memref<60xf32, #tpu.memory_space<smem>>
    %164 = vector.broadcast %163 : f32 to vector<2x128xf32>
    %165 = arith.mulf %82, %164 : vector<2x128xf32>
    %166 = arith.addf %162, %165 : vector<2x128xf32>
    %c10 = arith.constant 10 : index
    %167 = memref.load %arg4[%c10] : memref<60xf32, #tpu.memory_space<smem>>
    %168 = vector.broadcast %167 : f32 to vector<2x128xf32>
    %169 = arith.mulf %90, %168 : vector<2x128xf32>
    %170 = arith.addf %166, %169 : vector<2x128xf32>
    %c11 = arith.constant 11 : index
    %171 = memref.load %arg4[%c11] : memref<60xf32, #tpu.memory_space<smem>>
    %172 = vector.broadcast %171 : f32 to vector<2x128xf32>
    %173 = arith.mulf %98, %172 : vector<2x128xf32>
    %174 = arith.addf %170, %173 : vector<2x128xf32>
    %c12 = arith.constant 12 : index
    %175 = memref.load %arg4[%c12] : memref<60xf32, #tpu.memory_space<smem>>
    %176 = vector.broadcast %175 : f32 to vector<2x128xf32>
    %177 = arith.mulf %87, %176 : vector<2x128xf32>
    %178 = arith.addf %174, %177 : vector<2x128xf32>
    %c13 = arith.constant 13 : index
    %179 = memref.load %arg4[%c13] : memref<60xf32, #tpu.memory_space<smem>>
    %180 = vector.broadcast %179 : f32 to vector<2x128xf32>
    %181 = arith.mulf %95, %180 : vector<2x128xf32>
    %182 = arith.addf %178, %181 : vector<2x128xf32>
    %c14 = arith.constant 14 : index
    %183 = memref.load %arg4[%c14] : memref<60xf32, #tpu.memory_space<smem>>
    %184 = vector.broadcast %183 : f32 to vector<2x128xf32>
    %185 = arith.mulf %103, %184 : vector<2x128xf32>
    %186 = arith.addf %182, %185 : vector<2x128xf32>
    %c0_40 = arith.constant 0 : index
    %c0_41 = arith.constant 0 : index
    %c0_42 = arith.constant 0 : index
    %c0_43 = arith.constant 0 : index
    %187 = vector.load %arg7[%c0_40, %c0_41, %c0_42, %c0_43] : memref<1x4x2x128xf32, #tpu.memory_space<vmem>>, vector<1x1x2x128xf32>
    %188 = vector.shape_cast %187 : vector<1x1x2x128xf32> to vector<2x128xf32>
    %189 = vector.shape_cast %186 : vector<2x128xf32> to vector<1x1x2x128xf32>
    tpu.vector_store %arg7[%c0_40, %c0_41, %c0_42, %c0_43], %189 {strides = array<i32>} : memref<1x4x2x128xf32, #tpu.memory_space<vmem>>, vector<1x1x2x128xf32>,
    %c4_44 = arith.constant 4 : index
    %190 = memref.load %arg3[%c4_44] : memref<16xf32, #tpu.memory_space<smem>>
    %191 = vector.broadcast %190 : f32 to vector<2x128xf32>
    %192 = arith.mulf %105, %191 : vector<2x128xf32>
    %c5_45 = arith.constant 5 : index
    %193 = memref.load %arg3[%c5_45] : memref<16xf32, #tpu.memory_space<smem>>
    %194 = vector.broadcast %193 : f32 to vector<2x128xf32>
    %195 = arith.mulf %107, %194 : vector<2x128xf32>
    %196 = arith.addf %192, %195 : vector<2x128xf32>
    %c6_46 = arith.constant 6 : index
    %197 = memref.load %arg3[%c6_46] : memref<16xf32, #tpu.memory_space<smem>>
    %198 = vector.broadcast %197 : f32 to vector<2x128xf32>
    %199 = arith.mulf %109, %198 : vector<2x128xf32>
    %200 = arith.addf %196, %199 : vector<2x128xf32>
    %c7_47 = arith.constant 7 : index
    %201 = memref.load %arg3[%c7_47] : memref<16xf32, #tpu.memory_space<smem>>
    %202 = vector.broadcast %201 : f32 to vector<2x128xf32>
    %203 = arith.mulf %111, %202 : vector<2x128xf32>
    %204 = arith.addf %200, %203 : vector<2x128xf32>
    %c15 = arith.constant 15 : index
    %205 = memref.load %arg4[%c15] : memref<60xf32, #tpu.memory_space<smem>>
    %206 = vector.broadcast %205 : f32 to vector<2x128xf32>
    %207 = arith.mulf %59, %206 : vector<2x128xf32>
    %208 = arith.addf %204, %207 : vector<2x128xf32>
    %c16 = arith.constant 16 : index
    %209 = memref.load %arg4[%c16] : memref<60xf32, #tpu.memory_space<smem>>
    %210 = vector.broadcast %209 : f32 to vector<2x128xf32>
    %211 = arith.mulf %60, %210 : vector<2x128xf32>
    %212 = arith.addf %208, %211 : vector<2x128xf32>
    %c17 = arith.constant 17 : index
    %213 = memref.load %arg4[%c17] : memref<60xf32, #tpu.memory_space<smem>>
    %214 = vector.broadcast %213 : f32 to vector<2x128xf32>
    %215 = arith.mulf %61, %214 : vector<2x128xf32>
    %216 = arith.addf %212, %215 : vector<2x128xf32>
    %c18 = arith.constant 18 : index
    %217 = memref.load %arg4[%c18] : memref<60xf32, #tpu.memory_space<smem>>
    %218 = vector.broadcast %217 : f32 to vector<2x128xf32>
    %219 = arith.mulf %64, %218 : vector<2x128xf32>
    %220 = arith.addf %216, %219 : vector<2x128xf32>
    %c19 = arith.constant 19 : index
    %221 = memref.load %arg4[%c19] : memref<60xf32, #tpu.memory_space<smem>>
    %222 = vector.broadcast %221 : f32 to vector<2x128xf32>
    %223 = arith.mulf %70, %222 : vector<2x128xf32>
    %224 = arith.addf %220, %223 : vector<2x128xf32>
    %c20 = arith.constant 20 : index
    %225 = memref.load %arg4[%c20] : memref<60xf32, #tpu.memory_space<smem>>
    %226 = vector.broadcast %225 : f32 to vector<2x128xf32>
    %227 = arith.mulf %76, %226 : vector<2x128xf32>
    %228 = arith.addf %224, %227 : vector<2x128xf32>
    %c21 = arith.constant 21 : index
    %229 = memref.load %arg4[%c21] : memref<60xf32, #tpu.memory_space<smem>>
    %230 = vector.broadcast %229 : f32 to vector<2x128xf32>
    %231 = arith.mulf %67, %230 : vector<2x128xf32>
    %232 = arith.addf %228, %231 : vector<2x128xf32>
    %c22 = arith.constant 22 : index
    %233 = memref.load %arg4[%c22] : memref<60xf32, #tpu.memory_space<smem>>
    %234 = vector.broadcast %233 : f32 to vector<2x128xf32>
    %235 = arith.mulf %73, %234 : vector<2x128xf32>
    %236 = arith.addf %232, %235 : vector<2x128xf32>
    %c23 = arith.constant 23 : index
    %237 = memref.load %arg4[%c23] : memref<60xf32, #tpu.memory_space<smem>>
    %238 = vector.broadcast %237 : f32 to vector<2x128xf32>
    %239 = arith.mulf %79, %238 : vector<2x128xf32>
    %240 = arith.addf %236, %239 : vector<2x128xf32>
    %c24 = arith.constant 24 : index
    %241 = memref.load %arg4[%c24] : memref<60xf32, #tpu.memory_space<smem>>
    %242 = vector.broadcast %241 : f32 to vector<2x128xf32>
    %243 = arith.mulf %82, %242 : vector<2x128xf32>
    %244 = arith.addf %240, %243 : vector<2x128xf32>
    %c25 = arith.constant 25 : index
    %245 = memref.load %arg4[%c25] : memref<60xf32, #tpu.memory_space<smem>>
    %246 = vector.broadcast %245 : f32 to vector<2x128xf32>
    %247 = arith.mulf %90, %246 : vector<2x128xf32>
    %248 = arith.addf %244, %247 : vector<2x128xf32>
    %c26 = arith.constant 26 : index
    %249 = memref.load %arg4[%c26] : memref<60xf32, #tpu.memory_space<smem>>
    %250 = vector.broadcast %249 : f32 to vector<2x128xf32>
    %251 = arith.mulf %98, %250 : vector<2x128xf32>
    %252 = arith.addf %248, %251 : vector<2x128xf32>
    %c27 = arith.constant 27 : index
    %253 = memref.load %arg4[%c27] : memref<60xf32, #tpu.memory_space<smem>>
    %254 = vector.broadcast %253 : f32 to vector<2x128xf32>
    %255 = arith.mulf %87, %254 : vector<2x128xf32>
    %256 = arith.addf %252, %255 : vector<2x128xf32>
    %c28 = arith.constant 28 : index
    %257 = memref.load %arg4[%c28] : memref<60xf32, #tpu.memory_space<smem>>
    %258 = vector.broadcast %257 : f32 to vector<2x128xf32>
    %259 = arith.mulf %95, %258 : vector<2x128xf32>
    %260 = arith.addf %256, %259 : vector<2x128xf32>
    %c29 = arith.constant 29 : index
    %261 = memref.load %arg4[%c29] : memref<60xf32, #tpu.memory_space<smem>>
    %262 = vector.broadcast %261 : f32 to vector<2x128xf32>
    %263 = arith.mulf %103, %262 : vector<2x128xf32>
    %264 = arith.addf %260, %263 : vector<2x128xf32>
    %c0_48 = arith.constant 0 : index
    %c1_49 = arith.constant 1 : index
    %c0_50 = arith.constant 0 : index
    %c0_51 = arith.constant 0 : index
    %265 = vector.load %arg7[%c0_48, %c1_49, %c0_50, %c0_51] : memref<1x4x2x128xf32, #tpu.memory_space<vmem>>, vector<1x1x2x128xf32>
    %266 = vector.shape_cast %265 : vector<1x1x2x128xf32> to vector<2x128xf32>
    %267 = vector.shape_cast %264 : vector<2x128xf32> to vector<1x1x2x128xf32>
    tpu.vector_store %arg7[%c0_48, %c1_49, %c0_50, %c0_51], %267 {strides = array<i32>} : memref<1x4x2x128xf32, #tpu.memory_space<vmem>>, vector<1x1x2x128xf32>,
    %c8_52 = arith.constant 8 : index
    %268 = memref.load %arg3[%c8_52] : memref<16xf32, #tpu.memory_space<smem>>
    %269 = vector.broadcast %268 : f32 to vector<2x128xf32>
    %270 = arith.mulf %105, %269 : vector<2x128xf32>
    %c9_53 = arith.constant 9 : index
    %271 = memref.load %arg3[%c9_53] : memref<16xf32, #tpu.memory_space<smem>>
    %272 = vector.broadcast %271 : f32 to vector<2x128xf32>
    %273 = arith.mulf %107, %272 : vector<2x128xf32>
    %274 = arith.addf %270, %273 : vector<2x128xf32>
    %c10_54 = arith.constant 10 : index
    %275 = memref.load %arg3[%c10_54] : memref<16xf32, #tpu.memory_space<smem>>
    %276 = vector.broadcast %275 : f32 to vector<2x128xf32>
    %277 = arith.mulf %109, %276 : vector<2x128xf32>
    %278 = arith.addf %274, %277 : vector<2x128xf32>
    %c11_55 = arith.constant 11 : index
    %279 = memref.load %arg3[%c11_55] : memref<16xf32, #tpu.memory_space<smem>>
    %280 = vector.broadcast %279 : f32 to vector<2x128xf32>
    %281 = arith.mulf %111, %280 : vector<2x128xf32>
    %282 = arith.addf %278, %281 : vector<2x128xf32>
    %c30 = arith.constant 30 : index
    %283 = memref.load %arg4[%c30] : memref<60xf32, #tpu.memory_space<smem>>
    %284 = vector.broadcast %283 : f32 to vector<2x128xf32>
    %285 = arith.mulf %59, %284 : vector<2x128xf32>
    %286 = arith.addf %282, %285 : vector<2x128xf32>
    %c31 = arith.constant 31 : index
    %287 = memref.load %arg4[%c31] : memref<60xf32, #tpu.memory_space<smem>>
    %288 = vector.broadcast %287 : f32 to vector<2x128xf32>
    %289 = arith.mulf %60, %288 : vector<2x128xf32>
    %290 = arith.addf %286, %289 : vector<2x128xf32>
    %c32 = arith.constant 32 : index
    %291 = memref.load %arg4[%c32] : memref<60xf32, #tpu.memory_space<smem>>
    %292 = vector.broadcast %291 : f32 to vector<2x128xf32>
    %293 = arith.mulf %61, %292 : vector<2x128xf32>
    %294 = arith.addf %290, %293 : vector<2x128xf32>
    %c33 = arith.constant 33 : index
    %295 = memref.load %arg4[%c33] : memref<60xf32, #tpu.memory_space<smem>>
    %296 = vector.broadcast %295 : f32 to vector<2x128xf32>
    %297 = arith.mulf %64, %296 : vector<2x128xf32>
    %298 = arith.addf %294, %297 : vector<2x128xf32>
    %c34 = arith.constant 34 : index
    %299 = memref.load %arg4[%c34] : memref<60xf32, #tpu.memory_space<smem>>
    %300 = vector.broadcast %299 : f32 to vector<2x128xf32>
    %301 = arith.mulf %70, %300 : vector<2x128xf32>
    %302 = arith.addf %298, %301 : vector<2x128xf32>
    %c35 = arith.constant 35 : index
    %303 = memref.load %arg4[%c35] : memref<60xf32, #tpu.memory_space<smem>>
    %304 = vector.broadcast %303 : f32 to vector<2x128xf32>
    %305 = arith.mulf %76, %304 : vector<2x128xf32>
    %306 = arith.addf %302, %305 : vector<2x128xf32>
    %c36 = arith.constant 36 : index
    %307 = memref.load %arg4[%c36] : memref<60xf32, #tpu.memory_space<smem>>
    %308 = vector.broadcast %307 : f32 to vector<2x128xf32>
    %309 = arith.mulf %67, %308 : vector<2x128xf32>
    %310 = arith.addf %306, %309 : vector<2x128xf32>
    %c37 = arith.constant 37 : index
    %311 = memref.load %arg4[%c37] : memref<60xf32, #tpu.memory_space<smem>>
    %312 = vector.broadcast %311 : f32 to vector<2x128xf32>
    %313 = arith.mulf %73, %312 : vector<2x128xf32>
    %314 = arith.addf %310, %313 : vector<2x128xf32>
    %c38 = arith.constant 38 : index
    %315 = memref.load %arg4[%c38] : memref<60xf32, #tpu.memory_space<smem>>
    %316 = vector.broadcast %315 : f32 to vector<2x128xf32>
    %317 = arith.mulf %79, %316 : vector<2x128xf32>
    %318 = arith.addf %314, %317 : vector<2x128xf32>
    %c39 = arith.constant 39 : index
    %319 = memref.load %arg4[%c39] : memref<60xf32, #tpu.memory_space<smem>>
    %320 = vector.broadcast %319 : f32 to vector<2x128xf32>
    %321 = arith.mulf %82, %320 : vector<2x128xf32>
    %322 = arith.addf %318, %321 : vector<2x128xf32>
    %c40 = arith.constant 40 : index
    %323 = memref.load %arg4[%c40] : memref<60xf32, #tpu.memory_space<smem>>
    %324 = vector.broadcast %323 : f32 to vector<2x128xf32>
    %325 = arith.mulf %90, %324 : vector<2x128xf32>
    %326 = arith.addf %322, %325 : vector<2x128xf32>
    %c41 = arith.constant 41 : index
    %327 = memref.load %arg4[%c41] : memref<60xf32, #tpu.memory_space<smem>>
    %328 = vector.broadcast %327 : f32 to vector<2x128xf32>
    %329 = arith.mulf %98, %328 : vector<2x128xf32>
    %330 = arith.addf %326, %329 : vector<2x128xf32>
    %c42 = arith.constant 42 : index
    %331 = memref.load %arg4[%c42] : memref<60xf32, #tpu.memory_space<smem>>
    %332 = vector.broadcast %331 : f32 to vector<2x128xf32>
    %333 = arith.mulf %87, %332 : vector<2x128xf32>
    %334 = arith.addf %330, %333 : vector<2x128xf32>
    %c43 = arith.constant 43 : index
    %335 = memref.load %arg4[%c43] : memref<60xf32, #tpu.memory_space<smem>>
    %336 = vector.broadcast %335 : f32 to vector<2x128xf32>
    %337 = arith.mulf %95, %336 : vector<2x128xf32>
    %338 = arith.addf %334, %337 : vector<2x128xf32>
    %c44 = arith.constant 44 : index
    %339 = memref.load %arg4[%c44] : memref<60xf32, #tpu.memory_space<smem>>
    %340 = vector.broadcast %339 : f32 to vector<2x128xf32>
    %341 = arith.mulf %103, %340 : vector<2x128xf32>
    %342 = arith.addf %338, %341 : vector<2x128xf32>
    %c0_56 = arith.constant 0 : index
    %c2_57 = arith.constant 2 : index
    %c0_58 = arith.constant 0 : index
    %c0_59 = arith.constant 0 : index
    %343 = vector.load %arg7[%c0_56, %c2_57, %c0_58, %c0_59] : memref<1x4x2x128xf32, #tpu.memory_space<vmem>>, vector<1x1x2x128xf32>
    %344 = vector.shape_cast %343 : vector<1x1x2x128xf32> to vector<2x128xf32>
    %345 = vector.shape_cast %342 : vector<2x128xf32> to vector<1x1x2x128xf32>
    tpu.vector_store %arg7[%c0_56, %c2_57, %c0_58, %c0_59], %345 {strides = array<i32>} : memref<1x4x2x128xf32, #tpu.memory_space<vmem>>, vector<1x1x2x128xf32>,
    %c12_60 = arith.constant 12 : index
    %346 = memref.load %arg3[%c12_60] : memref<16xf32, #tpu.memory_space<smem>>
    %347 = vector.broadcast %346 : f32 to vector<2x128xf32>
    %348 = arith.mulf %105, %347 : vector<2x128xf32>
    %c13_61 = arith.constant 13 : index
    %349 = memref.load %arg3[%c13_61] : memref<16xf32, #tpu.memory_space<smem>>
    %350 = vector.broadcast %349 : f32 to vector<2x128xf32>
    %351 = arith.mulf %107, %350 : vector<2x128xf32>
    %352 = arith.addf %348, %351 : vector<2x128xf32>
    %c14_62 = arith.constant 14 : index
    %353 = memref.load %arg3[%c14_62] : memref<16xf32, #tpu.memory_space<smem>>
    %354 = vector.broadcast %353 : f32 to vector<2x128xf32>
    %355 = arith.mulf %109, %354 : vector<2x128xf32>
    %356 = arith.addf %352, %355 : vector<2x128xf32>
    %c15_63 = arith.constant 15 : index
    %357 = memref.load %arg3[%c15_63] : memref<16xf32, #tpu.memory_space<smem>>
    %358 = vector.broadcast %357 : f32 to vector<2x128xf32>
    %359 = arith.mulf %111, %358 : vector<2x128xf32>
    %360 = arith.addf %356, %359 : vector<2x128xf32>
    %c45 = arith.constant 45 : index
    %361 = memref.load %arg4[%c45] : memref<60xf32, #tpu.memory_space<smem>>
    %362 = vector.broadcast %361 : f32 to vector<2x128xf32>
    %363 = arith.mulf %59, %362 : vector<2x128xf32>
    %364 = arith.addf %360, %363 : vector<2x128xf32>
    %c46 = arith.constant 46 : index
    %365 = memref.load %arg4[%c46] : memref<60xf32, #tpu.memory_space<smem>>
    %366 = vector.broadcast %365 : f32 to vector<2x128xf32>
    %367 = arith.mulf %60, %366 : vector<2x128xf32>
    %368 = arith.addf %364, %367 : vector<2x128xf32>
    %c47 = arith.constant 47 : index
    %369 = memref.load %arg4[%c47] : memref<60xf32, #tpu.memory_space<smem>>
    %370 = vector.broadcast %369 : f32 to vector<2x128xf32>
    %371 = arith.mulf %61, %370 : vector<2x128xf32>
    %372 = arith.addf %368, %371 : vector<2x128xf32>
    %c48 = arith.constant 48 : index
    %373 = memref.load %arg4[%c48] : memref<60xf32, #tpu.memory_space<smem>>
    %374 = vector.broadcast %373 : f32 to vector<2x128xf32>
    %375 = arith.mulf %64, %374 : vector<2x128xf32>
    %376 = arith.addf %372, %375 : vector<2x128xf32>
    %c49 = arith.constant 49 : index
    %377 = memref.load %arg4[%c49] : memref<60xf32, #tpu.memory_space<smem>>
    %378 = vector.broadcast %377 : f32 to vector<2x128xf32>
    %379 = arith.mulf %70, %378 : vector<2x128xf32>
    %380 = arith.addf %376, %379 : vector<2x128xf32>
    %c50 = arith.constant 50 : index
    %381 = memref.load %arg4[%c50] : memref<60xf32, #tpu.memory_space<smem>>
    %382 = vector.broadcast %381 : f32 to vector<2x128xf32>
    %383 = arith.mulf %76, %382 : vector<2x128xf32>
    %384 = arith.addf %380, %383 : vector<2x128xf32>
    %c51 = arith.constant 51 : index
    %385 = memref.load %arg4[%c51] : memref<60xf32, #tpu.memory_space<smem>>
    %386 = vector.broadcast %385 : f32 to vector<2x128xf32>
    %387 = arith.mulf %67, %386 : vector<2x128xf32>
    %388 = arith.addf %384, %387 : vector<2x128xf32>
    %c52 = arith.constant 52 : index
    %389 = memref.load %arg4[%c52] : memref<60xf32, #tpu.memory_space<smem>>
    %390 = vector.broadcast %389 : f32 to vector<2x128xf32>
    %391 = arith.mulf %73, %390 : vector<2x128xf32>
    %392 = arith.addf %388, %391 : vector<2x128xf32>
    %c53 = arith.constant 53 : index
    %393 = memref.load %arg4[%c53] : memref<60xf32, #tpu.memory_space<smem>>
    %394 = vector.broadcast %393 : f32 to vector<2x128xf32>
    %395 = arith.mulf %79, %394 : vector<2x128xf32>
    %396 = arith.addf %392, %395 : vector<2x128xf32>
    %c54 = arith.constant 54 : index
    %397 = memref.load %arg4[%c54] : memref<60xf32, #tpu.memory_space<smem>>
    %398 = vector.broadcast %397 : f32 to vector<2x128xf32>
    %399 = arith.mulf %82, %398 : vector<2x128xf32>
    %400 = arith.addf %396, %399 : vector<2x128xf32>
    %c55 = arith.constant 55 : index
    %401 = memref.load %arg4[%c55] : memref<60xf32, #tpu.memory_space<smem>>
    %402 = vector.broadcast %401 : f32 to vector<2x128xf32>
    %403 = arith.mulf %90, %402 : vector<2x128xf32>
    %404 = arith.addf %400, %403 : vector<2x128xf32>
    %c56 = arith.constant 56 : index
    %405 = memref.load %arg4[%c56] : memref<60xf32, #tpu.memory_space<smem>>
    %406 = vector.broadcast %405 : f32 to vector<2x128xf32>
    %407 = arith.mulf %98, %406 : vector<2x128xf32>
    %408 = arith.addf %404, %407 : vector<2x128xf32>
    %c57 = arith.constant 57 : index
    %409 = memref.load %arg4[%c57] : memref<60xf32, #tpu.memory_space<smem>>
    %410 = vector.broadcast %409 : f32 to vector<2x128xf32>
    %411 = arith.mulf %87, %410 : vector<2x128xf32>
    %412 = arith.addf %408, %411 : vector<2x128xf32>
    %c58 = arith.constant 58 : index
    %413 = memref.load %arg4[%c58] : memref<60xf32, #tpu.memory_space<smem>>
    %414 = vector.broadcast %413 : f32 to vector<2x128xf32>
    %415 = arith.mulf %95, %414 : vector<2x128xf32>
    %416 = arith.addf %412, %415 : vector<2x128xf32>
    %c59 = arith.constant 59 : index
    %417 = memref.load %arg4[%c59] : memref<60xf32, #tpu.memory_space<smem>>
    %418 = vector.broadcast %417 : f32 to vector<2x128xf32>
    %419 = arith.mulf %103, %418 : vector<2x128xf32>
    %420 = arith.addf %416, %419 : vector<2x128xf32>
    %c0_64 = arith.constant 0 : index
    %c3_65 = arith.constant 3 : index
    %c0_66 = arith.constant 0 : index
    %c0_67 = arith.constant 0 : index
    %421 = vector.load %arg7[%c0_64, %c3_65, %c0_66, %c0_67] : memref<1x4x2x128xf32, #tpu.memory_space<vmem>>, vector<1x1x2x128xf32>
    %422 = vector.shape_cast %421 : vector<1x1x2x128xf32> to vector<2x128xf32>
    %423 = vector.shape_cast %420 : vector<2x128xf32> to vector<1x1x2x128xf32>
    tpu.vector_store %arg7[%c0_64, %c3_65, %c0_66, %c0_67], %423 {strides = array<i32>} : memref<1x4x2x128xf32, #tpu.memory_space<vmem>>, vector<1x1x2x128xf32>,
    return
  }
  func.func @transform_0(%arg0: i32, %arg1: i32) -> i32 {
    %c0_i32 = arith.constant 0 : i32
    %c0_i32_0 = arith.constant 0 : i32
    return %c0_i32 : i32
  }
  func.func @transform_1(%arg0: i32, %arg1: i32) -> i32 {
    %c0_i32 = arith.constant 0 : i32
    %c0_i32_0 = arith.constant 0 : i32
    return %c0_i32 : i32
  }
  func.func @transform_2(%arg0: i32, %arg1: i32) -> i32 {
    %c0_i32 = arith.constant 0 : i32
    %c0_i32_0 = arith.constant 0 : i32
    return %c0_i32 : i32
  }
  func.func @transform_3(%arg0: i32, %arg1: i32) -> (i32, i32, i32) {
    %c0_i32 = arith.constant 0 : i32
    %c0_i32_0 = arith.constant 0 : i32
    %c0_i32_1 = arith.constant 0 : i32
    return %c0_i32, %arg0, %c0_i32_0 : i32, i32, i32
  }
  func.func @transform_4(%arg0: i32, %arg1: i32) -> (i32, i32, i32, i32) {
    %c0_i32 = arith.constant 0 : i32
    %c0_i32_0 = arith.constant 0 : i32
    %c0_i32_1 = arith.constant 0 : i32
    return %arg1, %c0_i32, %arg0, %c0_i32_0 : i32, i32, i32, i32
  }
  func.func @transform_5(%arg0: i32, %arg1: i32) -> (i32, i32, i32, i32) {
    %c0_i32 = arith.constant 0 : i32
    %c0_i32_0 = arith.constant 0 : i32
    %c0_i32_1 = arith.constant 0 : i32
    return %arg1, %c0_i32, %arg0, %c0_i32_0 : i32, i32, i32, i32
  }
}

</mosaic_0001>

<llo_original>
// kernel: tpu_custom_call.1
$region0: #{tpu_custom_call.1}
  #allocation0 [shape = 'u32[]', space=smem, size = 0x4, offset = 0x4, fixed_abs, tag = 'smem constant byte address 0x4 - core index']
  #allocation1 [shape = 'u32[144,128]{1,0:T(1,128)}', space=vmem, size = 0x12000, scoped, tag = 'internal scratch']
  %s0 = inlined_call_operand.hbm [shape: f32[18], index: 0, kind: input, shape index: {}]
  %s1 = inlined_call_operand.vmem [shape: f32[16], index: 1, kind: input, shape index: {}]
  %s2 = inlined_call_operand.hbm [shape: f32[60], index: 2, kind: input, shape index: {}]
  %s3 = inlined_call_operand.vmem [shape: f32[2,2,128], index: 3, kind: input, shape index: {}]
  %s4 = inlined_call_operand.hbm [shape: f32[2,4,2,128], index: 4, kind: input, shape index: {}]
  %s5 = inlined_call_operand.hbm [shape: f32[2,4,2,128], index: 5, kind: output, shape index: {}]
  %s6 = sld [smem:[#allocation0]]
  $region69: #{tpu_custom_call.1} parent=0
    _
  %s8 = ssub.s32 1, %s6
  %s9 = scalar_select 0, %s8, %s6
  $region1: #{tpu_custom_call.1} parent=0
    #allocation2 [shape = 'u8[512]{0}', space=smem, size = 0x200, scoped, tag = 'input window, operand 0, single buffered']
    #allocation3 [shape = 's32[2]{0}', space=sflag, size = 0x8, scoped, tag = 'scoped memory for tpu_custom_call.1']
    #allocation4 [shape = 's32[2]{0}', space=sflag, size = 0x8, scoped, tag = 'scoped memory for tpu_custom_call.1']
    #allocation5 [shape = 's32[2]{0}', space=sflag, size = 0x8, scoped, tag = 'scoped memory for tpu_custom_call.1']
    #allocation6 [shape = 's32[2]{0}', space=sflag, size = 0x8, scoped, tag = 'scoped memory for tpu_custom_call.1']
    #allocation7 [shape = 'u8[512]{0}', space=smem, size = 0x200, scoped, tag = 'input window, operand 1, single buffered']
    #allocation8 [shape = 'u8[512]{0}', space=smem, size = 0x200, scoped, tag = 'input window, operand 2, single buffered']
    #allocation9 [shape = 's32[1]{0}', space=sflag, size = 0x4, scoped, tag = 'scoped memory for tpu_custom_call.1']
    #allocation10 [shape = 'u8[8192]{0}', space=vmem, size = 0x2000, scoped, tag = 'input window, operand 4']
    #allocation11 [shape = 'u8[8192]{0}', space=vmem, size = 0x2000, scoped, tag = 'output window, operand 0']
    %10 = vsyncpa [#allocation5], 0
    %11 = vsyncpa [#allocation6], 0
    %12 = vsyncpa [#allocation9], 0
    %13 = vsyncpa [#allocation3], 0
    %s14 = scalar_lea.sflag [#allocation3], 1
    %15 = vsyncpa %s14, 0
    %16 = vsyncpa [#allocation4], 0
    %s17 = scalar_lea.sflag [#allocation4], 1
    %18 = vsyncpa %s17, 0
    loop: start=0, step=1, limit=4
    $region2: #{tpu_custom_call.1} parent=1 // loop_pre_header
      _
    $region3: #{tpu_custom_call.1} parent=1 // loop_header
      %s20 = sphi 0, %s24
      %p21 = scmp.ge.s32.totalorder %s20, 4
      %s27 = sphi 0, %s39
      %s28 = sphi 0, %s35
      %s29 = sphi 0, %s27
      %s30 = sphi 0, %s28
      %s31 = sphi 0, %s29
      %s32 = sphi 0, %s30
      %s40 = sphi 0, %s40
      %s42 = sphi 0, %s40
      %s43 = sphi 0, %s42
      %s57 = sphi 0, %s43
      %s61 = sphi 0, %s61
      %s63 = sphi 0, %s61
      %s64 = sphi 0, %s63
      %s78 = sphi 0, %s64
      %s82 = sphi 0, %s82
      %s84 = sphi 0, %s82
      %s85 = sphi 0, %s84
      %s99 = sphi 0, %s85
      %s105 = sphi 0, %s107
      %s108 = sphi 0, %s105
      %s109 = sphi 0, %s108
      %s125 = sphi 0, %s109
      %s133 = sphi 0, %s135
      %s136 = sphi 0, %s133
      %s137 = sphi 0, %s136
      %s153 = sphi 0, %s137
      %s161 = sphi 0, %s163
      %s164 = sphi 0, %s161
      %s165 = sphi 0, %s164
      %s181 = sphi 0, %s165
    $region4: #{tpu_custom_call.1} parent=1 // loop_header_branch
      %23 = sbr.rel (%p21) target = $region8
    $region5: #{tpu_custom_call.1} parent=1 // loop_body
      %s25 = ssub.s32 %s20, 1
      %s26 = ssub.s32 %s20, 2
      %s33 = sadd.s32 1, %s28
      %p34 = scmp.ge.s32.totalorder %s33, 2
      %s35 = scalar_select %p34, 0, %s33
      %s36 = sadd.s32 1, %s27
      %s37 = scalar_select %p34, %s36, %s27
      %p38 = scmp.ge.s32.totalorder %s37, 1
      %s39 = scalar_select %p38, 0, %s37
      %s41 = sadd.s32 %s40, 1
      %p44 = scmp.eq.s32.totalorder %s20, 1
      %p45 = scmp.ne.s32.totalorder %s40, %s42
      %p46 = scmp.eq.s32.totalorder %s20, 0
      %p47 = por %p45, %p46
      %p48 = scmp.ne.s32.totalorder %s40, %s42
      %p49 = scmp.eq.s32.totalorder %s25, 1
      %p50 = por %p48, %p49
      %p51 = scmp.ne.s32.totalorder %s42, %s43
      %p52 = scmp.eq.s32.totalorder %s25, 0
      %p53 = por %p51, %p52
      %p54 = scmp.ne.s32.totalorder %s42, %s43
      %p55 = scmp.eq.s32.totalorder %s26, 1
      %p56 = por %p54, %p55
      %p58 = scmp.ne.s32.totalorder %s43, %s57
      %p59 = scmp.eq.s32.totalorder %s26, 0
      %p60 = por %p58, %p59
      %s62 = sadd.s32 %s61, 1
      %p65 = scmp.eq.s32.totalorder %s20, 1
      %p66 = scmp.ne.s32.totalorder %s61, %s63
      %p67 = scmp.eq.s32.totalorder %s20, 0
      %p68 = por %p66, %p67
      %p69 = scmp.ne.s32.totalorder %s61, %s63
      %p70 = scmp.eq.s32.totalorder %s25, 1
      %p71 = por %p69, %p70
      %p72 = scmp.ne.s32.totalorder %s63, %s64
      %p73 = scmp.eq.s32.totalorder %s25, 0
      %p74 = por %p72, %p73
      %p75 = scmp.ne.s32.totalorder %s63, %s64
      %p76 = scmp.eq.s32.totalorder %s26, 1
      %p77 = por %p75, %p76
      %p79 = scmp.ne.s32.totalorder %s64, %s78
      %p80 = scmp.eq.s32.totalorder %s26, 0
      %p81 = por %p79, %p80
      %s83 = sadd.s32 %s82, 1
      %p86 = scmp.eq.s32.totalorder %s20, 1
      %p87 = scmp.ne.s32.totalorder %s82, %s84
      %p88 = scmp.eq.s32.totalorder %s20, 0
      %p89 = por %p87, %p88
      %p90 = scmp.ne.s32.totalorder %s82, %s84
      %p91 = scmp.eq.s32.totalorder %s25, 1
      %p92 = por %p90, %p91
      %p93 = scmp.ne.s32.totalorder %s84, %s85
      %p94 = scmp.eq.s32.totalorder %s25, 0
      %p95 = por %p93, %p94
      %p96 = scmp.ne.s32.totalorder %s84, %s85
      %p97 = scmp.eq.s32.totalorder %s26, 1
      %p98 = por %p96, %p97
      %p100 = scmp.ne.s32.totalorder %s85, %s99
      %p101 = scmp.eq.s32.totalorder %s26, 0
      %p102 = por %p100, %p101
      %s103 = ssub.s32 %s27, %s39
      %p104 = scmp.eq.s32.totalorder %s103, 0
      %s106 = sadd.s32 %s105, 1
      %s107 = scalar_select %p104, %s105, %s106
      %p110 = pneg %p104
      %p111 = scmp.eq.s32.totalorder %s20, 1
      %p112 = por %p110, %p111
      %p113 = scmp.ne.s32.totalorder %s105, %s108
      %p114 = scmp.eq.s32.totalorder %s20, 0
      %p115 = por %p113, %p114
      %p116 = scmp.ne.s32.totalorder %s105, %s108
      %p117 = scmp.eq.s32.totalorder %s25, 1
      %p118 = por %p116, %p117
      %p119 = scmp.ne.s32.totalorder %s108, %s109
      %p120 = scmp.eq.s32.totalorder %s25, 0
      %p121 = por %p119, %p120
      %p122 = scmp.ne.s32.totalorder %s108, %s109
      %p123 = scmp.eq.s32.totalorder %s26, 1
      %p124 = por %p122, %p123
      %p126 = scmp.ne.s32.totalorder %s109, %s125
      %p127 = scmp.eq.s32.totalorder %s26, 0
      %p128 = por %p126, %p127
      %s129 = ssub.s32 %s28, %s35
      %s130 = ssub.s32 %s27, %s39
      %s131 = sor.u32 %s129, %s130
      %p132 = scmp.eq.s32.totalorder %s131, 0
      %s134 = sadd.s32 %s133, 1
      %s135 = scalar_select %p132, %s133, %s134
      %p138 = pneg %p132
      %p139 = scmp.eq.s32.totalorder %s20, 1
      %p140 = por %p138, %p139
      %p141 = scmp.ne.s32.totalorder %s133, %s136
      %p142 = scmp.eq.s32.totalorder %s20, 0
      %p143 = por %p141, %p142
      %p144 = scmp.ne.s32.totalorder %s133, %s136
      %p145 = scmp.eq.s32.totalorder %s25, 1
      %p146 = por %p144, %p145
      %p147 = scmp.ne.s32.totalorder %s136, %s137
      %p148 = scmp.eq.s32.totalorder %s25, 0
      %p149 = por %p147, %p148
      %p150 = scmp.ne.s32.totalorder %s136, %s137
      %p151 = scmp.eq.s32.totalorder %s26, 1
      %p152 = por %p150, %p151
      %p154 = scmp.ne.s32.totalorder %s137, %s153
      %p155 = scmp.eq.s32.totalorder %s26, 0
      %p156 = por %p154, %p155
      %s157 = ssub.s32 %s28, %s35
      %s158 = ssub.s32 %s27, %s39
      %s159 = sor.u32 %s157, %s158
      %p160 = scmp.eq.s32.totalorder %s159, 0
      %s162 = sadd.s32 %s161, 1
      %s163 = scalar_select %p160, %s161, %s162
      %p166 = pneg %p160
      %p167 = scmp.eq.s32.totalorder %s20, 1
      %p168 = por %p166, %p167
      %p169 = scmp.ne.s32.totalorder %s161, %s164
      %p170 = scmp.eq.s32.totalorder %s20, 0
      %p171 = por %p169, %p170
      %p172 = scmp.ne.s32.totalorder %s161, %s164
      %p173 = scmp.eq.s32.totalorder %s25, 1
      %p174 = por %p172, %p173
      %p175 = scmp.ne.s32.totalorder %s164, %s165
      %p176 = scmp.eq.s32.totalorder %s25, 0
      %p177 = por %p175, %p176
      %p178 = scmp.ne.s32.totalorder %s164, %s165
      %p179 = scmp.eq.s32.totalorder %s26, 1
      %p180 = por %p178, %p179
      %p182 = scmp.ne.s32.totalorder %s165, %s181
      %p183 = scmp.eq.s32.totalorder %s26, 0
      %p184 = por %p182, %p183
      %p185 = scmp.le.s32.totalorder 1, %s20
      %p186 = scmp.lt.s32.totalorder %s20, 3
      %p187 = pnand %p185, %p186
      %p188 = pneg %p187
      // Predicated region
      $region9: #{tpu_custom_call.1} parent=5 // pred_check
        _
      $region10: #{tpu_custom_call.1} parent=5 // pred_check_branch
        %190 = sbr.rel (%p187) target = $region12
      $region11: #{tpu_custom_call.1} parent=5 // pred_region
        %s191 = ssub.s32 %s20, 1
        // Predicated region
        $region13: #{tpu_custom_call.1} parent=11 // pred_check
          %p192 = pneg %p53
        $region14: #{tpu_custom_call.1} parent=11 // pred_check_branch
          %194 = sbr.rel (%p192) target = $region16
        $region15: #{tpu_custom_call.1} parent=11 // pred_region
          %s196 = ssub.s32 16, 16
          %197 = vsyncadd [#allocation5], %s196
          %200 = dma.hbm_to_smem %s0, 16, [#allocation2], [#allocation5]
        $region16: #{tpu_custom_call.1} parent=11 // pred_fallthru
          _
        // Predicated region
        $region17: #{tpu_custom_call.1} parent=11 // pred_check
          %p201 = pneg %p74
        $region18: #{tpu_custom_call.1} parent=11 // pred_check_branch
          %203 = sbr.rel (%p201) target = $region20
        $region19: #{tpu_custom_call.1} parent=11 // pred_region
          %s205 = ssub.s32 16, 16
          %206 = vsyncadd [#allocation6], %s205
          %s208 = sshll.u32 %s1, 4
          %s209 = int_to_ptr.vmem [resolvable:$true] %s208
          %211 = dma.vmem_to_smem %s209, 16, [#allocation7], [#allocation6]
        $region20: #{tpu_custom_call.1} parent=11 // pred_fallthru
          _
        // Predicated region
        $region21: #{tpu_custom_call.1} parent=11 // pred_check
          %p212 = pneg %p95
        $region22: #{tpu_custom_call.1} parent=11 // pred_check_branch
          %214 = sbr.rel (%p212) target = $region24
        $region23: #{tpu_custom_call.1} parent=11 // pred_region
          %s216 = ssub.s32 16, 16
          %217 = vsyncadd [#allocation9], %s216
          %220 = dma.hbm_to_smem %s2, 16, [#allocation8], [#allocation9]
        $region24: #{tpu_custom_call.1} parent=11 // pred_fallthru
          _
        // Predicated region
        $region25: #{tpu_custom_call.1} parent=11 // pred_check
          %p221 = pneg %p121
        $region26: #{tpu_custom_call.1} parent=11 // pred_check_branch
          %223 = sbr.rel (%p221) target = $region28
        $region27: #{tpu_custom_call.1} parent=11 // pred_region
          %p224 = scmp.lt.s32.totalorder %s29, 0
          %s225 = scalar_select %p224, %s29, 0
          %s226 = smul.addr %s225, 2
          %s227 = scalar_lea.vmem %s3, %s226
        $region28: #{tpu_custom_call.1} parent=11 // pred_fallthru
          _
      $region12: #{tpu_custom_call.1} parent=5 // pred_fallthru
        _
      %p228 = scmp.lt.s32.totalorder %s20, 2
      // Predicated region
      $region29: #{tpu_custom_call.1} parent=5 // pred_check
        %p229 = pneg %p228
      $region30: #{tpu_custom_call.1} parent=5 // pred_check_branch
        %231 = sbr.rel (%p229) target = $region32
      $region31: #{tpu_custom_call.1} parent=5 // pred_region
        // Predicated region
        $region33: #{tpu_custom_call.1} parent=31 // pred_check
          %p232 = pneg %p143
        $region34: #{tpu_custom_call.1} parent=31 // pred_check_branch
          %234 = sbr.rel (%p232) target = $region36
        $region35: #{tpu_custom_call.1} parent=31 // pred_region
          %s235 = sand.u32 %s133, 1
          %s236 = scalar_lea.sflag [#allocation3], %s235
          %s237 = sand.u32 %s133, 1
          %s238 = smul.addr %s237, 8
          %s239 = scalar_lea.vmem [#allocation10], %s238
          %s241 = ssub.s32 128, 128
          %242 = vsyncadd %s236, %s241
          %s243 = smul.addr %s28, 4
          %s244 = sadd.s32 %s27, %s243
          %s245 = smul.addr %s244, 32
          %s246 = scalar_lea.hbm %s4, %s245
          %s247 = sshll.u32 %s239, 4
          %s248 = int_to_ptr.vmem [resolvable:$true] %s247
          %253 = dma.hbm_to_vmem [thread:$0]  %s246, 128, %s248, %s236, 32, 32, 2
        $region36: #{tpu_custom_call.1} parent=31 // pred_fallthru
          _
      $region32: #{tpu_custom_call.1} parent=5 // pred_fallthru
        _
      %p254 = scmp.le.s32.totalorder 1, %s20
      %p255 = scmp.lt.s32.totalorder %s20, 3
      %p256 = pnand %p254, %p255
      %p257 = pneg %p256
      // Predicated region
      $region37: #{tpu_custom_call.1} parent=5 // pred_check
        _
      $region38: #{tpu_custom_call.1} parent=5 // pred_check_branch
        %259 = sbr.rel (%p256) target = $region40
      $region39: #{tpu_custom_call.1} parent=5 // pred_region
        %s260 = ssub.s32 %s20, 1
        // Predicated region
        $region41: #{tpu_custom_call.1} parent=39 // pred_check
          %p261 = pneg %p53
        $region42: #{tpu_custom_call.1} parent=39 // pred_check_branch
          %263 = sbr.rel (%p261) target = $region44
        $region43: #{tpu_custom_call.1} parent=39 // pred_region
          %264 = dma.done [#allocation5], 16
        $region44: #{tpu_custom_call.1} parent=39 // pred_fallthru
          _
        // Predicated region
        $region45: #{tpu_custom_call.1} parent=39 // pred_check
          %p265 = pneg %p74
        $region46: #{tpu_custom_call.1} parent=39 // pred_check_branch
          %267 = sbr.rel (%p265) target = $region48
        $region47: #{tpu_custom_call.1} parent=39 // pred_region
          %268 = dma.done [#allocation6], 16
        $region48: #{tpu_custom_call.1} parent=39 // pred_fallthru
          _
        // Predicated region
        $region49: #{tpu_custom_call.1} parent=39 // pred_check
          %p269 = pneg %p95
        $region50: #{tpu_custom_call.1} parent=39 // pred_check_branch
          %271 = sbr.rel (%p269) target = $region52
        $region51: #{tpu_custom_call.1} parent=39 // pred_region
          %272 = dma.done [#allocation9], 16
        $region52: #{tpu_custom_call.1} parent=39 // pred_fallthru
          _
        %s273 = sand.u32 %s136, 1
        %s274 = scalar_lea.sflag [#allocation3], %s273
        %s275 = sand.u32 %s136, 1
        %s276 = smul.addr %s275, 8
        %s277 = scalar_lea.vmem [#allocation10], %s276
        // Predicated region
        $region53: #{tpu_custom_call.1} parent=39 // pred_check
          %p278 = pneg %p149
        $region54: #{tpu_custom_call.1} parent=39 // pred_check_branch
          %280 = sbr.rel (%p278) target = $region56
        $region55: #{tpu_custom_call.1} parent=39 // pred_region
          %281 = dma.done %s274, 128
        $region56: #{tpu_custom_call.1} parent=39 // pred_fallthru
          _
        %282 = sfence
        %p283 = pneg %p53
        %p284 = pneg %p50
        %p285 = pneg %p74
        %p286 = pneg %p71
        %p287 = pneg %p95
        %p288 = pneg %p92
        %p289 = scmp.lt.s32.totalorder %s29, 0
        %s290 = scalar_select %p289, %s29, 0
        %s291 = smul.addr %s290, 2
        %s292 = scalar_lea.vmem %s3, %s291
        %p293 = pneg %p121
        %p294 = pneg %p118
        %s295 = sand.u32 %s136, 1
        %s296 = scalar_lea.sflag [#allocation3], %s295
        %s297 = sand.u32 %s136, 1
        %s298 = smul.addr %s297, 8
        %s299 = scalar_lea.vmem [#allocation10], %s298
        %p300 = pneg %p149
        %p301 = pneg %p146
        %p302 = pneg %p177
        %p303 = pneg %p174
        %s304 = sand.u32 %s164, 1
        %s305 = scalar_lea.sflag [#allocation4], %s304
        %s306 = sand.u32 %s164, 1
        %s307 = smul.addr %s306, 8
        %s308 = scalar_lea.vmem [#allocation11], %s307
        %p309 = scmp.lt.s32.totalorder %s29, 0
        %s310 = scalar_select %p309, %s29, 0
        %s311 = smul.addr %s310, 2
        %s312 = scalar_lea.vmem %s3, %s311
        %s313 = smul.u32 %s30, 9
        %s314 = sld [smem:[#allocation2 + %s313]]
        %s315 = sadd.s32 %s313, 1
        %s316 = sld [smem:[#allocation2 + %s315]]
        %s317 = sadd.s32 %s313, 2
        %s318 = sld [smem:[#allocation2 + %s317]]
        %s319 = sadd.s32 %s313, 3
        %s320 = sld [smem:[#allocation2 + %s319]]
        %s321 = sadd.s32 %s313, 4
        %s322 = sld [smem:[#allocation2 + %s321]]
        %s323 = sadd.s32 %s313, 5
        %s324 = sld [smem:[#allocation2 + %s323]]
        %s325 = sadd.s32 %s313, 6
        %s326 = sld [smem:[#allocation2 + %s325]]
        %s327 = sadd.s32 %s313, 7
        %s328 = sld [smem:[#allocation2 + %s327]]
        %s329 = sadd.s32 %s313, 8
        %s330 = sld [smem:[#allocation2 + %s329]]
        %v331 = vld [vmem:[%s312] sm:$0x3]
        %s332 = scalar_lea.vmem %s312, 2
        %v333 = vld [vmem:[%s332] sm:$0x3]
        %v334 = vstv %s314
        %v335 = vmul.f32 %v334, %v331
        %v336 = vstv %s316
        %v337 = vmul.f32 %v336, %v333
        %v338 = vadd.f32 %v335, %v337
        %v339 = vstv %s318
        %v340 = vadd.f32 %v338, %v339
        %v341 = vstv %s320
        %v342 = vmul.f32 %v341, %v331
        %v343 = vstv %s322
        %v344 = vmul.f32 %v343, %v333
        %v345 = vadd.f32 %v342, %v344
        %v346 = vstv %s324
        %v347 = vadd.f32 %v345, %v346
        %v348 = vstv %s326
        %v349 = vmul.f32 %v348, %v331
        %v350 = vstv %s328
        %v351 = vmul.f32 %v350, %v333
        %v352 = vadd.f32 %v349, %v351
        %v353 = vstv %s330
        %v354 = vadd.f32 %v352, %v353
        %v355 = vmul.f32 %v340, %v340
        %v356 = vmul.f32 %v347, %v347
        %v357 = vadd.f32 %v355, %v356
        %v358 = vmul.f32 %v354, %v354
        %v359 = vadd.f32 %v357, %v358
        %v360 = vrsqrt.pop %v359
        %v361 = vmul.f32 %v340, %v360
        %v362 = vmul.f32 %v347, %v360
        %v363 = vmul.f32 %v354, %v360
        %v364 = vmul.f32 %v361, 3.1415927
        %v365 = vand.u32 2147483647, %v364
        %vm366 = vcmp.le.f32.partialorder %v365, 0.7853982
        %vm367 = vcmp.lt.s32.totalorder %v364, 0
        %v368 = vand.u32 %v364, 2139095040
        %v369 = vshrl.u32 %v368, 23
        %v370 = vsub.s32 %v369, 127
        %v371 = vand.u32 2147483647, %v364
        %v372 = vand.u32 %v371, 8388607
        %v373 = vor.u32 %v372, 8388608
        %v374 = vsub.s32 0, %v373
        %v375 = vadd.s32 %v370, 1
        %vm376 = vcmp.gt.s32.totalorder %v375, 0
        %v377 = vsel %vm376, %v375, 0
        %v378 = vshrl.u32 %v377, 5
        %v379 = vand.u32 %v377, 31
        %v380 = vsub.s32 32, %v379
        %v381 = vshrl.u32 683565275, %v380
        %v382 = vshll.u32 683565275, %v379
        %v383 = vshrl.u32 2475754826, %v380
        %v384 = vor.u32 %v382, %v383
        %v385 = vshll.u32 2475754826, %v379
        %v386 = vshrl.u32 2131351028, %v380
        %v387 = vor.u32 %v385, %v386
        %v388 = vshll.u32 2131351028, %v379
        %v389 = vshrl.u32 2102212464, %v380
        %v390 = vor.u32 %v388, %v389
        %v391 = vshll.u32 2102212464, %v379
        %v392 = vshrl.u32 920167782, %v380
        %v393 = vor.u32 %v391, %v392
        %v394 = vshll.u32 920167782, %v379
        %v395 = vshrl.u32 1326507024, %v380
        %v396 = vor.u32 %v394, %v395
        %vm397 = vcmp.lt.s32.totalorder %v378, 1
        %vm398 = vcmp.lt.s32.totalorder %v378, 2
        %vm399 = vcmp.lt.s32.totalorder %v378, 3
        %vm400 = vcmp.lt.s32.totalorder %v378, 4
        %v401 = vsel %vm397, %v381, %v384
        %v402 = vsel %vm400, %v390, 2102212464
        %v403 = vsel %vm399, %v387, %v402
        %v404 = vsel %vm398, %v401, %v403
        %v405 = vsel %vm397, %v384, %v387
        %v406 = vsel %vm400, %v393, 920167782
        %v407 = vsel %vm399, %v390, %v406
        %v408 = vsel %vm398, %v405, %v407
        %v409 = vsel %vm397, %v387, %v390
        %v410 = vsel %vm400, %v396, 1326507024
        %v411 = vsel %vm399, %v393, %v410
        %v412 = vsel %vm398, %v409, %v411
        %v413 = vshll.u32 %v373, 8
        %v414 = vmul.u32.u64.compose %v413, %v412
        %v415 = vextract.low.u32 %v414
        %v416 = vextract.high.u32 %v414
        %v417 = vmul.u32.u64.compose %v413, %v408
        %v418 = vextract.low.u32 %v417
        %v419 = vextract.high.u32 %v417
        %v420 = vmul.u32 %v413, %v404
        %v421 = vadd.s32 %v416, %v418
        %vm422 = vc.u32 %v416, %v418
        %v423 = vadd.s32 %v419, 1
        %v424 = vsel %vm422, %v423, %v419
        %v425 = vadd.s32 %v420, %v424
        %v426 = vadd.s32 %v425, 536870912
        %v427 = vshrl.u32 %v426, 30
        %v428 = vshll.u32 %v427, 30
        %v429 = vsub.s32 %v425, %v428
        %vm430 = vcmp.lt.s32.totalorder %v429, 0
        %v431 = vsub.s32 0, %v429
        %v432 = vsel %vm430, %v431, %v429
        %v433 = vclz %v432
        %v434 = vsub.s32 %v433, 2
        %vm435 = vcmp.gt.s32.totalorder 0, %v434
        %v436 = vsel %vm435, 0, %v434
        %v437 = vsub.s32 32, %v436
        %v438 = vshll.u32 %v429, %v436
        %v439 = vshrl.u32 %v421, %v437
        %v440 = vor.u32 %v438, %v439
        %v441 = vsub.s32 4294967266, %v436
        %v442 = vadd.s32 %v441, 127
        %v443 = vshll.u32 %v442, 23
        %v444 = vor.u32 4788187, %v443
        %v445 = vand.u32 2147483647, %v444
        %v447 = vcvt.s32.f32 %v440
        %v448 = vmul.f32 %v447, %v445
        %v449 = vxor.u32 %v448, 2147483648
        %v450 = vsel %vm367, %v449, %v448
        %v451 = vsub.s32 4, %v427
        %v452 = vsel %vm367, %v451, %v427
        %v453 = vsel %vm366, %v364, %v450
        %v454 = vsel %vm366, 0, %v452
        %v455 = vcosq.f32.pop %v453
        %v456 = vsinq.f32.pop %v453
        %vm457 = vweird.f32 %v364
        %v458 = vadd.s32 %v454, 3
        %v459 = vand.u32 %v458, 3
        %vm460 = vcmp.lt.s32.totalorder %v459, 2
        %vm461 = vcmp.eq.s32.totalorder %v459, 0
        %v462 = vxor.u32 %v456, 2147483648
        %v463 = vsel %vm461, %v455, %v462
        %vm464 = vcmp.eq.s32.totalorder %v459, 2
        %v465 = vxor.u32 %v455, 2147483648
        %v466 = vsel %vm464, %v465, %v456
        %v467 = vsel %vm460, %v463, %v466
        %v468 = vsel %vm457, nan, %v467
        %v469 = vand.u32 2147483647, %v364
        %vm470 = vcmp.le.f32.partialorder %v469, 0.7853982
        %vm471 = vcmp.lt.s32.totalorder %v364, 0
        %v472 = vand.u32 %v364, 2139095040
        %v473 = vshrl.u32 %v472, 23
        %v474 = vsub.s32 %v473, 127
        %v475 = vand.u32 2147483647, %v364
        %v476 = vand.u32 %v475, 8388607
        %v477 = vor.u32 %v476, 8388608
        %v478 = vsub.s32 0, %v477
        %v479 = vadd.s32 %v474, 1
        %vm480 = vcmp.gt.s32.totalorder %v479, 0
        %v481 = vsel %vm480, %v479, 0
        %v482 = vshrl.u32 %v481, 5
        %v483 = vand.u32 %v481, 31
        %v484 = vsub.s32 32, %v483
        %v485 = vshrl.u32 683565275, %v484
        %v486 = vshll.u32 683565275, %v483
        %v487 = vshrl.u32 2475754826, %v484
        %v488 = vor.u32 %v486, %v487
        %v489 = vshll.u32 2475754826, %v483
        %v490 = vshrl.u32 2131351028, %v484
        %v491 = vor.u32 %v489, %v490
        %v492 = vshll.u32 2131351028, %v483
        %v493 = vshrl.u32 2102212464, %v484
        %v494 = vor.u32 %v492, %v493
        %v495 = vshll.u32 2102212464, %v483
        %v496 = vshrl.u32 920167782, %v484
        %v497 = vor.u32 %v495, %v496
        %v498 = vshll.u32 920167782, %v483
        %v499 = vshrl.u32 1326507024, %v484
        %v500 = vor.u32 %v498, %v499
        %vm501 = vcmp.lt.s32.totalorder %v482, 1
        %vm502 = vcmp.lt.s32.totalorder %v482, 2
        %vm503 = vcmp.lt.s32.totalorder %v482, 3
        %vm504 = vcmp.lt.s32.totalorder %v482, 4
        %v505 = vsel %vm501, %v485, %v488
        %v506 = vsel %vm504, %v494, 2102212464
        %v507 = vsel %vm503, %v491, %v506
        %v508 = vsel %vm502, %v505, %v507
        %v509 = vsel %vm501, %v488, %v491
        %v510 = vsel %vm504, %v497, 920167782
        %v511 = vsel %vm503, %v494, %v510
        %v512 = vsel %vm502, %v509, %v511
        %v513 = vsel %vm501, %v491, %v494
        %v514 = vsel %vm504, %v500, 1326507024
        %v515 = vsel %vm503, %v497, %v514
        %v516 = vsel %vm502, %v513, %v515
        %v517 = vshll.u32 %v477, 8
        %v518 = vmul.u32.u64.compose %v517, %v516
        %v519 = vextract.low.u32 %v518
        %v520 = vextract.high.u32 %v518
        %v521 = vmul.u32.u64.compose %v517, %v512
        %v522 = vextract.low.u32 %v521
        %v523 = vextract.high.u32 %v521
        %v524 = vmul.u32 %v517, %v508
        %v525 = vadd.s32 %v520, %v522
        %vm526 = vc.u32 %v520, %v522
        %v527 = vadd.s32 %v523, 1
        %v528 = vsel %vm526, %v527, %v523
        %v529 = vadd.s32 %v524, %v528
        %v530 = vadd.s32 %v529, 536870912
        %v531 = vshrl.u32 %v530, 30
        %v532 = vshll.u32 %v531, 30
        %v533 = vsub.s32 %v529, %v532
        %vm534 = vcmp.lt.s32.totalorder %v533, 0
        %v535 = vsub.s32 0, %v533
        %v536 = vsel %vm534, %v535, %v533
        %v537 = vclz %v536
        %v538 = vsub.s32 %v537, 2
        %vm539 = vcmp.gt.s32.totalorder 0, %v538
        %v540 = vsel %vm539, 0, %v538
        %v541 = vsub.s32 32, %v540
        %v542 = vshll.u32 %v533, %v540
        %v543 = vshrl.u32 %v525, %v541
        %v544 = vor.u32 %v542, %v543
        %v545 = vsub.s32 4294967266, %v540
        %v546 = vadd.s32 %v545, 127
        %v547 = vshll.u32 %v546, 23
        %v548 = vor.u32 4788187, %v547
        %v549 = vand.u32 2147483647, %v548
        %v551 = vcvt.s32.f32 %v544
        %v552 = vmul.f32 %v551, %v549
        %v553 = vxor.u32 %v552, 2147483648
        %v554 = vsel %vm471, %v553, %v552
        %v555 = vsub.s32 4, %v531
        %v556 = vsel %vm471, %v555, %v531
        %v557 = vsel %vm470, %v364, %v554
        %v558 = vsel %vm470, 0, %v556
        %v559 = vcosq.f32.pop %v557
        %v560 = vsinq.f32.pop %v557
        %vm561 = vweird.f32 %v364
        %v562 = vand.u32 %v558, 3
        %vm563 = vcmp.lt.s32.totalorder %v562, 2
        %vm564 = vcmp.eq.s32.totalorder %v562, 0
        %v565 = vxor.u32 %v560, 2147483648
        %v566 = vsel %vm564, %v559, %v565
        %vm567 = vcmp.eq.s32.totalorder %v562, 2
        %v568 = vxor.u32 %v559, 2147483648
        %v569 = vsel %vm567, %v568, %v560
        %v570 = vsel %vm563, %v566, %v569
        %v571 = vsel %vm561, nan, %v570
        %v572 = vmul.f32 %v362, 3.1415927
        %v573 = vand.u32 2147483647, %v572
        %vm574 = vcmp.le.f32.partialorder %v573, 0.7853982
        %vm575 = vcmp.lt.s32.totalorder %v572, 0
        %v576 = vand.u32 %v572, 2139095040
        %v577 = vshrl.u32 %v576, 23
        %v578 = vsub.s32 %v577, 127
        %v579 = vand.u32 2147483647, %v572
        %v580 = vand.u32 %v579, 8388607
        %v581 = vor.u32 %v580, 8388608
        %v582 = vsub.s32 0, %v581
        %v583 = vadd.s32 %v578, 1
        %vm584 = vcmp.gt.s32.totalorder %v583, 0
        %v585 = vsel %vm584, %v583, 0
        %v586 = vshrl.u32 %v585, 5
        %v587 = vand.u32 %v585, 31
        %v588 = vsub.s32 32, %v587
        %v589 = vshrl.u32 683565275, %v588
        %v590 = vshll.u32 683565275, %v587
        %v591 = vshrl.u32 2475754826, %v588
        %v592 = vor.u32 %v590, %v591
        %v593 = vshll.u32 2475754826, %v587
        %v594 = vshrl.u32 2131351028, %v588
        %v595 = vor.u32 %v593, %v594
        %v596 = vshll.u32 2131351028, %v587
        %v597 = vshrl.u32 2102212464, %v588
        %v598 = vor.u32 %v596, %v597
        %v599 = vshll.u32 2102212464, %v587
        %v600 = vshrl.u32 920167782, %v588
        %v601 = vor.u32 %v599, %v600
        %v602 = vshll.u32 920167782, %v587
        %v603 = vshrl.u32 1326507024, %v588
        %v604 = vor.u32 %v602, %v603
        %vm605 = vcmp.lt.s32.totalorder %v586, 1
        %vm606 = vcmp.lt.s32.totalorder %v586, 2
        %vm607 = vcmp.lt.s32.totalorder %v586, 3
        %vm608 = vcmp.lt.s32.totalorder %v586, 4
        %v609 = vsel %vm605, %v589, %v592
        %v610 = vsel %vm608, %v598, 2102212464
        %v611 = vsel %vm607, %v595, %v610
        %v612 = vsel %vm606, %v609, %v611
        %v613 = vsel %vm605, %v592, %v595
        %v614 = vsel %vm608, %v601, 920167782
        %v615 = vsel %vm607, %v598, %v614
        %v616 = vsel %vm606, %v613, %v615
        %v617 = vsel %vm605, %v595, %v598
        %v618 = vsel %vm608, %v604, 1326507024
        %v619 = vsel %vm607, %v601, %v618
        %v620 = vsel %vm606, %v617, %v619
        %v621 = vshll.u32 %v581, 8
        %v622 = vmul.u32.u64.compose %v621, %v620
        %v623 = vextract.low.u32 %v622
        %v624 = vextract.high.u32 %v622
        %v625 = vmul.u32.u64.compose %v621, %v616
        %v626 = vextract.low.u32 %v625
        %v627 = vextract.high.u32 %v625
        %v628 = vmul.u32 %v621, %v612
        %v629 = vadd.s32 %v624, %v626
        %vm630 = vc.u32 %v624, %v626
        %v631 = vadd.s32 %v627, 1
        %v632 = vsel %vm630, %v631, %v627
        %v633 = vadd.s32 %v628, %v632
        %v634 = vadd.s32 %v633, 536870912
        %v635 = vshrl.u32 %v634, 30
        %v636 = vshll.u32 %v635, 30
        %v637 = vsub.s32 %v633, %v636
        %vm638 = vcmp.lt.s32.totalorder %v637, 0
        %v639 = vsub.s32 0, %v637
        %v640 = vsel %vm638, %v639, %v637
        %v641 = vclz %v640
        %v642 = vsub.s32 %v641, 2
        %vm643 = vcmp.gt.s32.totalorder 0, %v642
        %v644 = vsel %vm643, 0, %v642
        %v645 = vsub.s32 32, %v644
        %v646 = vshll.u32 %v637, %v644
        %v647 = vshrl.u32 %v629, %v645
        %v648 = vor.u32 %v646, %v647
        %v649 = vsub.s32 4294967266, %v644
        %v650 = vadd.s32 %v649, 127
        %v651 = vshll.u32 %v650, 23
        %v652 = vor.u32 4788187, %v651
        %v653 = vand.u32 2147483647, %v652
        %v655 = vcvt.s32.f32 %v648
        %v656 = vmul.f32 %v655, %v653
        %v657 = vxor.u32 %v656, 2147483648
        %v658 = vsel %vm575, %v657, %v656
        %v659 = vsub.s32 4, %v635
        %v660 = vsel %vm575, %v659, %v635
        %v661 = vsel %vm574, %v572, %v658
        %v662 = vsel %vm574, 0, %v660
        %v663 = vcosq.f32.pop %v661
        %v664 = vsinq.f32.pop %v661
        %vm665 = vweird.f32 %v572
        %v666 = vadd.s32 %v662, 3
        %v667 = vand.u32 %v666, 3
        %vm668 = vcmp.lt.s32.totalorder %v667, 2
        %vm669 = vcmp.eq.s32.totalorder %v667, 0
        %v670 = vxor.u32 %v664, 2147483648
        %v671 = vsel %vm669, %v663, %v670
        %vm672 = vcmp.eq.s32.totalorder %v667, 2
        %v673 = vxor.u32 %v663, 2147483648
        %v674 = vsel %vm672, %v673, %v664
        %v675 = vsel %vm668, %v671, %v674
        %v676 = vsel %vm665, nan, %v675
        %v677 = vand.u32 2147483647, %v572
        %vm678 = vcmp.le.f32.partialorder %v677, 0.7853982
        %vm679 = vcmp.lt.s32.totalorder %v572, 0
        %v680 = vand.u32 %v572, 2139095040
        %v681 = vshrl.u32 %v680, 23
        %v682 = vsub.s32 %v681, 127
        %v683 = vand.u32 2147483647, %v572
        %v684 = vand.u32 %v683, 8388607
        %v685 = vor.u32 %v684, 8388608
        %v686 = vsub.s32 0, %v685
        %v687 = vadd.s32 %v682, 1
        %vm688 = vcmp.gt.s32.totalorder %v687, 0
        %v689 = vsel %vm688, %v687, 0
        %v690 = vshrl.u32 %v689, 5
        %v691 = vand.u32 %v689, 31
        %v692 = vsub.s32 32, %v691
        %v693 = vshrl.u32 683565275, %v692
        %v694 = vshll.u32 683565275, %v691
        %v695 = vshrl.u32 2475754826, %v692
        %v696 = vor.u32 %v694, %v695
        %v697 = vshll.u32 2475754826, %v691
        %v698 = vshrl.u32 2131351028, %v692
        %v699 = vor.u32 %v697, %v698
        %v700 = vshll.u32 2131351028, %v691
        %v701 = vshrl.u32 2102212464, %v692
        %v702 = vor.u32 %v700, %v701
        %v703 = vshll.u32 2102212464, %v691
        %v704 = vshrl.u32 920167782, %v692
        %v705 = vor.u32 %v703, %v704
        %v706 = vshll.u32 920167782, %v691
        %v707 = vshrl.u32 1326507024, %v692
        %v708 = vor.u32 %v706, %v707
        %vm709 = vcmp.lt.s32.totalorder %v690, 1
        %vm710 = vcmp.lt.s32.totalorder %v690, 2
        %vm711 = vcmp.lt.s32.totalorder %v690, 3
        %vm712 = vcmp.lt.s32.totalorder %v690, 4
        %v713 = vsel %vm709, %v693, %v696
        %v714 = vsel %vm712, %v702, 2102212464
        %v715 = vsel %vm711, %v699, %v714
        %v716 = vsel %vm710, %v713, %v715
        %v717 = vsel %vm709, %v696, %v699
        %v718 = vsel %vm712, %v705, 920167782
        %v719 = vsel %vm711, %v702, %v718
        %v720 = vsel %vm710, %v717, %v719
        %v721 = vsel %vm709, %v699, %v702
        %v722 = vsel %vm712, %v708, 1326507024
        %v723 = vsel %vm711, %v705, %v722
        %v724 = vsel %vm710, %v721, %v723
        %v725 = vshll.u32 %v685, 8
        %v726 = vmul.u32.u64.compose %v725, %v724
        %v727 = vextract.low.u32 %v726
        %v728 = vextract.high.u32 %v726
        %v729 = vmul.u32.u64.compose %v725, %v720
        %v730 = vextract.low.u32 %v729
        %v731 = vextract.high.u32 %v729
        %v732 = vmul.u32 %v725, %v716
        %v733 = vadd.s32 %v728, %v730
        %vm734 = vc.u32 %v728, %v730
        %v735 = vadd.s32 %v731, 1
        %v736 = vsel %vm734, %v735, %v731
        %v737 = vadd.s32 %v732, %v736
        %v738 = vadd.s32 %v737, 536870912
        %v739 = vshrl.u32 %v738, 30
        %v740 = vshll.u32 %v739, 30
        %v741 = vsub.s32 %v737, %v740
        %vm742 = vcmp.lt.s32.totalorder %v741, 0
        %v743 = vsub.s32 0, %v741
        %v744 = vsel %vm742, %v743, %v741
        %v745 = vclz %v744
        %v746 = vsub.s32 %v745, 2
        %vm747 = vcmp.gt.s32.totalorder 0, %v746
        %v748 = vsel %vm747, 0, %v746
        %v749 = vsub.s32 32, %v748
        %v750 = vshll.u32 %v741, %v748
        %v751 = vshrl.u32 %v733, %v749
        %v752 = vor.u32 %v750, %v751
        %v753 = vsub.s32 4294967266, %v748
        %v754 = vadd.s32 %v753, 127
        %v755 = vshll.u32 %v754, 23
        %v756 = vor.u32 4788187, %v755
        %v757 = vand.u32 2147483647, %v756
        %v759 = vcvt.s32.f32 %v752
        %v760 = vmul.f32 %v759, %v757
        %v761 = vxor.u32 %v760, 2147483648
        %v762 = vsel %vm679, %v761, %v760
        %v763 = vsub.s32 4, %v739
        %v764 = vsel %vm679, %v763, %v739
        %v765 = vsel %vm678, %v572, %v762
        %v766 = vsel %vm678, 0, %v764
        %v767 = vcosq.f32.pop %v765
        %v768 = vsinq.f32.pop %v765
        %vm769 = vweird.f32 %v572
        %v770 = vand.u32 %v766, 3
        %vm771 = vcmp.lt.s32.totalorder %v770, 2
        %vm772 = vcmp.eq.s32.totalorder %v770, 0
        %v773 = vxor.u32 %v768, 2147483648
        %v774 = vsel %vm772, %v767, %v773
        %vm775 = vcmp.eq.s32.totalorder %v770, 2
        %v776 = vxor.u32 %v767, 2147483648
        %v777 = vsel %vm775, %v776, %v768
        %v778 = vsel %vm771, %v774, %v777
        %v779 = vsel %vm769, nan, %v778
        %v780 = vmul.f32 %v363, 3.1415927
        %v781 = vand.u32 2147483647, %v780
        %vm782 = vcmp.le.f32.partialorder %v781, 0.7853982
        %vm783 = vcmp.lt.s32.totalorder %v780, 0
        %v784 = vand.u32 %v780, 2139095040
        %v785 = vshrl.u32 %v784, 23
        %v786 = vsub.s32 %v785, 127
        %v787 = vand.u32 2147483647, %v780
        %v788 = vand.u32 %v787, 8388607
        %v789 = vor.u32 %v788, 8388608
        %v790 = vsub.s32 0, %v789
        %v791 = vadd.s32 %v786, 1
        %vm792 = vcmp.gt.s32.totalorder %v791, 0
        %v793 = vsel %vm792, %v791, 0
        %v794 = vshrl.u32 %v793, 5
        %v795 = vand.u32 %v793, 31
        %v796 = vsub.s32 32, %v795
        %v797 = vshrl.u32 683565275, %v796
        %v798 = vshll.u32 683565275, %v795
        %v799 = vshrl.u32 2475754826, %v796
        %v800 = vor.u32 %v798, %v799
        %v801 = vshll.u32 2475754826, %v795
        %v802 = vshrl.u32 2131351028, %v796
        %v803 = vor.u32 %v801, %v802
        %v804 = vshll.u32 2131351028, %v795
        %v805 = vshrl.u32 2102212464, %v796
        %v806 = vor.u32 %v804, %v805
        %v807 = vshll.u32 2102212464, %v795
        %v808 = vshrl.u32 920167782, %v796
        %v809 = vor.u32 %v807, %v808
        %v810 = vshll.u32 920167782, %v795
        %v811 = vshrl.u32 1326507024, %v796
        %v812 = vor.u32 %v810, %v811
        %vm813 = vcmp.lt.s32.totalorder %v794, 1
        %vm814 = vcmp.lt.s32.totalorder %v794, 2
        %vm815 = vcmp.lt.s32.totalorder %v794, 3
        %vm816 = vcmp.lt.s32.totalorder %v794, 4
        %v817 = vsel %vm813, %v797, %v800
        %v818 = vsel %vm816, %v806, 2102212464
        %v819 = vsel %vm815, %v803, %v818
        %v820 = vsel %vm814, %v817, %v819
        %v821 = vsel %vm813, %v800, %v803
        %v822 = vsel %vm816, %v809, 920167782
        %v823 = vsel %vm815, %v806, %v822
        %v824 = vsel %vm814, %v821, %v823
        %v825 = vsel %vm813, %v803, %v806
        %v826 = vsel %vm816, %v812, 1326507024
        %v827 = vsel %vm815, %v809, %v826
        %v828 = vsel %vm814, %v825, %v827
        %v829 = vshll.u32 %v789, 8
        %v830 = vmul.u32.u64.compose %v829, %v828
        %v831 = vextract.low.u32 %v830
        %v832 = vextract.high.u32 %v830
        %v833 = vmul.u32.u64.compose %v829, %v824
        %v834 = vextract.low.u32 %v833
        %v835 = vextract.high.u32 %v833
        %v836 = vmul.u32 %v829, %v820
        %v837 = vadd.s32 %v832, %v834
        %vm838 = vc.u32 %v832, %v834
        %v839 = vadd.s32 %v835, 1
        %v840 = vsel %vm838, %v839, %v835
        %v841 = vadd.s32 %v836, %v840
        %v842 = vadd.s32 %v841, 536870912
        %v843 = vshrl.u32 %v842, 30
        %v844 = vshll.u32 %v843, 30
        %v845 = vsub.s32 %v841, %v844
        %vm846 = vcmp.lt.s32.totalorder %v845, 0
        %v847 = vsub.s32 0, %v845
        %v848 = vsel %vm846, %v847, %v845
        %v849 = vclz %v848
        %v850 = vsub.s32 %v849, 2
        %vm851 = vcmp.gt.s32.totalorder 0, %v850
        %v852 = vsel %vm851, 0, %v850
        %v853 = vsub.s32 32, %v852
        %v854 = vshll.u32 %v845, %v852
        %v855 = vshrl.u32 %v837, %v853
        %v856 = vor.u32 %v854, %v855
        %v857 = vsub.s32 4294967266, %v852
        %v858 = vadd.s32 %v857, 127
        %v859 = vshll.u32 %v858, 23
        %v860 = vor.u32 4788187, %v859
        %v861 = vand.u32 2147483647, %v860
        %v863 = vcvt.s32.f32 %v856
        %v864 = vmul.f32 %v863, %v861
        %v865 = vxor.u32 %v864, 2147483648
        %v866 = vsel %vm783, %v865, %v864
        %v867 = vsub.s32 4, %v843
        %v868 = vsel %vm783, %v867, %v843
        %v869 = vsel %vm782, %v780, %v866
        %v870 = vsel %vm782, 0, %v868
        %v871 = vcosq.f32.pop %v869
        %v872 = vsinq.f32.pop %v869
        %vm873 = vweird.f32 %v780
        %v874 = vadd.s32 %v870, 3
        %v875 = vand.u32 %v874, 3
        %vm876 = vcmp.lt.s32.totalorder %v875, 2
        %vm877 = vcmp.eq.s32.totalorder %v875, 0
        %v878 = vxor.u32 %v872, 2147483648
        %v879 = vsel %vm877, %v871, %v878
        %vm880 = vcmp.eq.s32.totalorder %v875, 2
        %v881 = vxor.u32 %v871, 2147483648
        %v882 = vsel %vm880, %v881, %v872
        %v883 = vsel %vm876, %v879, %v882
        %v884 = vsel %vm873, nan, %v883
        %v885 = vand.u32 2147483647, %v780
        %vm886 = vcmp.le.f32.partialorder %v885, 0.7853982
        %vm887 = vcmp.lt.s32.totalorder %v780, 0
        %v888 = vand.u32 %v780, 2139095040
        %v889 = vshrl.u32 %v888, 23
        %v890 = vsub.s32 %v889, 127
        %v891 = vand.u32 2147483647, %v780
        %v892 = vand.u32 %v891, 8388607
        %v893 = vor.u32 %v892, 8388608
        %v894 = vsub.s32 0, %v893
        %v895 = vadd.s32 %v890, 1
        %vm896 = vcmp.gt.s32.totalorder %v895, 0
        %v897 = vsel %vm896, %v895, 0
        %v898 = vshrl.u32 %v897, 5
        %v899 = vand.u32 %v897, 31
        %v900 = vsub.s32 32, %v899
        %v901 = vshrl.u32 683565275, %v900
        %v902 = vshll.u32 683565275, %v899
        %v903 = vshrl.u32 2475754826, %v900
        %v904 = vor.u32 %v902, %v903
        %v905 = vshll.u32 2475754826, %v899
        %v906 = vshrl.u32 2131351028, %v900
        %v907 = vor.u32 %v905, %v906
        %v908 = vshll.u32 2131351028, %v899
        %v909 = vshrl.u32 2102212464, %v900
        %v910 = vor.u32 %v908, %v909
        %v911 = vshll.u32 2102212464, %v899
        %v912 = vshrl.u32 920167782, %v900
        %v913 = vor.u32 %v911, %v912
        %v914 = vshll.u32 920167782, %v899
        %v915 = vshrl.u32 1326507024, %v900
        %v916 = vor.u32 %v914, %v915
        %vm917 = vcmp.lt.s32.totalorder %v898, 1
        %vm918 = vcmp.lt.s32.totalorder %v898, 2
        %vm919 = vcmp.lt.s32.totalorder %v898, 3
        %vm920 = vcmp.lt.s32.totalorder %v898, 4
        %v921 = vsel %vm917, %v901, %v904
        %v922 = vsel %vm920, %v910, 2102212464
        %v923 = vsel %vm919, %v907, %v922
        %v924 = vsel %vm918, %v921, %v923
        %v925 = vsel %vm917, %v904, %v907
        %v926 = vsel %vm920, %v913, 920167782
        %v927 = vsel %vm919, %v910, %v926
        %v928 = vsel %vm918, %v925, %v927
        %v929 = vsel %vm917, %v907, %v910
        %v930 = vsel %vm920, %v916, 1326507024
        %v931 = vsel %vm919, %v913, %v930
        %v932 = vsel %vm918, %v929, %v931
        %v933 = vshll.u32 %v893, 8
        %v934 = vmul.u32.u64.compose %v933, %v932
        %v935 = vextract.low.u32 %v934
        %v936 = vextract.high.u32 %v934
        %v937 = vmul.u32.u64.compose %v933, %v928
        %v938 = vextract.low.u32 %v937
        %v939 = vextract.high.u32 %v937
        %v940 = vmul.u32 %v933, %v924
        %v941 = vadd.s32 %v936, %v938
        %vm942 = vc.u32 %v936, %v938
        %v943 = vadd.s32 %v939, 1
        %v944 = vsel %vm942, %v943, %v939
        %v945 = vadd.s32 %v940, %v944
        %v946 = vadd.s32 %v945, 536870912
        %v947 = vshrl.u32 %v946, 30
        %v948 = vshll.u32 %v947, 30
        %v949 = vsub.s32 %v945, %v948
        %vm950 = vcmp.lt.s32.totalorder %v949, 0
        %v951 = vsub.s32 0, %v949
        %v952 = vsel %vm950, %v951, %v949
        %v953 = vclz %v952
        %v954 = vsub.s32 %v953, 2
        %vm955 = vcmp.gt.s32.totalorder 0, %v954
        %v956 = vsel %vm955, 0, %v954
        %v957 = vsub.s32 32, %v956
        %v958 = vshll.u32 %v949, %v956
        %v959 = vshrl.u32 %v941, %v957
        %v960 = vor.u32 %v958, %v959
        %v961 = vsub.s32 4294967266, %v956
        %v962 = vadd.s32 %v961, 127
        %v963 = vshll.u32 %v962, 23
        %v964 = vor.u32 4788187, %v963
        %v965 = vand.u32 2147483647, %v964
        %v967 = vcvt.s32.f32 %v960
        %v968 = vmul.f32 %v967, %v965
        %v969 = vxor.u32 %v968, 2147483648
        %v970 = vsel %vm887, %v969, %v968
        %v971 = vsub.s32 4, %v947
        %v972 = vsel %vm887, %v971, %v947
        %v973 = vsel %vm886, %v780, %v970
        %v974 = vsel %vm886, 0, %v972
        %v975 = vcosq.f32.pop %v973
        %v976 = vsinq.f32.pop %v973
        %vm977 = vweird.f32 %v780
        %v978 = vand.u32 %v974, 3
        %vm979 = vcmp.lt.s32.totalorder %v978, 2
        %vm980 = vcmp.eq.s32.totalorder %v978, 0
        %v981 = vxor.u32 %v976, 2147483648
        %v982 = vsel %vm980, %v975, %v981
        %vm983 = vcmp.eq.s32.totalorder %v978, 2
        %v984 = vxor.u32 %v975, 2147483648
        %v985 = vsel %vm983, %v984, %v976
        %v986 = vsel %vm979, %v982, %v985
        %v987 = vsel %vm977, nan, %v986
        %v988 = vmul.f32 %v468, 2.0
        %v989 = vmul.f32 %v988, %v571
        %v990 = vmul.f32 %v468, %v468
        %v991 = vmul.f32 %v990, 2.0
        %v992 = vsub.f32 1.0, %v991
        %v993 = vmul.f32 %v676, 2.0
        %v994 = vmul.f32 %v993, %v779
        %v995 = vmul.f32 %v676, %v676
        %v996 = vmul.f32 %v995, 2.0
        %v997 = vsub.f32 1.0, %v996
        %v998 = vmul.f32 %v884, 2.0
        %v999 = vmul.f32 %v998, %v987
        %v1000 = vmul.f32 %v884, %v884
        %v1001 = vmul.f32 %v1000, 2.0
        %v1002 = vsub.f32 1.0, %v1001
        %v1003 = vld [vmem:[%s277] sm:$0x3]
        %s1004 = scalar_lea.vmem %s277, 2 [#allocation10]
        %v1005 = vld [vmem:[%s1004] sm:$0x3]
        %s1006 = scalar_lea.vmem %s277, 4 [#allocation10]
        %v1007 = vld [vmem:[%s1006] sm:$0x3]
        %s1008 = scalar_lea.vmem %s277, 6 [#allocation10]
        %v1009 = vld [vmem:[%s1008] sm:$0x3]
        %s1010 = sld [smem:[#allocation7]]
        %v1011 = vstv %s1010
        %v1012 = vmul.f32 %v1003, %v1011
        %s1013 = sld [smem:[#allocation7 + $0x1]]
        %v1014 = vstv %s1013
        %v1015 = vmul.f32 %v1005, %v1014
        %v1016 = vadd.f32 %v1012, %v1015
        %s1017 = sld [smem:[#allocation7 + $0x2]]
        %v1018 = vstv %s1017
        %v1019 = vmul.f32 %v1007, %v1018
        %v1020 = vadd.f32 %v1016, %v1019
        %s1021 = sld [smem:[#allocation7 + $0x3]]
        %v1022 = vstv %s1021
        %v1023 = vmul.f32 %v1009, %v1022
        %v1024 = vadd.f32 %v1020, %v1023
        %s1025 = sld [smem:[#allocation8]]
        %v1026 = vstv %s1025
        %v1027 = vmul.f32 %v361, %v1026
        %v1028 = vadd.f32 %v1024, %v1027
        %s1029 = sld [smem:[#allocation8 + $0x1]]
        %v1030 = vstv %s1029
        %v1031 = vmul.f32 %v362, %v1030
        %v1032 = vadd.f32 %v1028, %v1031
        %s1033 = sld [smem:[#allocation8 + $0x2]]
        %v1034 = vstv %s1033
        %v1035 = vmul.f32 %v363, %v1034
        %v1036 = vadd.f32 %v1032, %v1035
        %s1037 = sld [smem:[#allocation8 + $0x3]]
        %v1038 = vstv %s1037
        %v1039 = vmul.f32 %v468, %v1038
        %v1040 = vadd.f32 %v1036, %v1039
        %s1041 = sld [smem:[#allocation8 + $0x4]]
        %v1042 = vstv %s1041
        %v1043 = vmul.f32 %v676, %v1042
        %v1044 = vadd.f32 %v1040, %v1043
        %s1045 = sld [smem:[#allocation8 + $0x5]]
        %v1046 = vstv %s1045
        %v1047 = vmul.f32 %v884, %v1046
        %v1048 = vadd.f32 %v1044, %v1047
        %s1049 = sld [smem:[#allocation8 + $0x6]]
        %v1050 = vstv %s1049
        %v1051 = vmul.f32 %v571, %v1050
        %v1052 = vadd.f32 %v1048, %v1051
        %s1053 = sld [smem:[#allocation8 + $0x7]]
        %v1054 = vstv %s1053
        %v1055 = vmul.f32 %v779, %v1054
        %v1056 = vadd.f32 %v1052, %v1055
        %s1057 = sld [smem:[#allocation8 + $0x8]]
        %v1058 = vstv %s1057
        %v1059 = vmul.f32 %v987, %v1058
        %v1060 = vadd.f32 %v1056, %v1059
        %s1061 = sld [smem:[#allocation8 + $0x9]]
        %v1062 = vstv %s1061
        %v1063 = vmul.f32 %v989, %v1062
        %v1064 = vadd.f32 %v1060, %v1063
        %s1065 = sld [smem:[#allocation8 + $0xa]]
        %v1066 = vstv %s1065
        %v1067 = vmul.f32 %v994, %v1066
        %v1068 = vadd.f32 %v1064, %v1067
        %s1069 = sld [smem:[#allocation8 + $0xb]]
        %v1070 = vstv %s1069
        %v1071 = vmul.f32 %v999, %v1070
        %v1072 = vadd.f32 %v1068, %v1071
        %s1073 = sld [smem:[#allocation8 + $0xc]]
        %v1074 = vstv %s1073
        %v1075 = vmul.f32 %v992, %v1074
        %v1076 = vadd.f32 %v1072, %v1075
        %s1077 = sld [smem:[#allocation8 + $0xd]]
        %v1078 = vstv %s1077
        %v1079 = vmul.f32 %v997, %v1078
        %v1080 = vadd.f32 %v1076, %v1079
        %s1081 = sld [smem:[#allocation8 + $0xe]]
        %v1082 = vstv %s1081
        %v1083 = vmul.f32 %v1002, %v1082
        %v1084 = vadd.f32 %v1080, %v1083
        %1085 = vst [vmem:[%s308] sm:$0x3] %v1084
        %s1086 = sld [smem:[#allocation7 + $0x4]]
        %v1087 = vstv %s1086
        %v1088 = vmul.f32 %v1003, %v1087
        %s1089 = sld [smem:[#allocation7 + $0x5]]
        %v1090 = vstv %s1089
        %v1091 = vmul.f32 %v1005, %v1090
        %v1092 = vadd.f32 %v1088, %v1091
        %s1093 = sld [smem:[#allocation7 + $0x6]]
        %v1094 = vstv %s1093
        %v1095 = vmul.f32 %v1007, %v1094
        %v1096 = vadd.f32 %v1092, %v1095
        %s1097 = sld [smem:[#allocation7 + $0x7]]
        %v1098 = vstv %s1097
        %v1099 = vmul.f32 %v1009, %v1098
        %v1100 = vadd.f32 %v1096, %v1099
        %s1101 = sld [smem:[#allocation8 + $0xf]]
        %v1102 = vstv %s1101
        %v1103 = vmul.f32 %v361, %v1102
        %v1104 = vadd.f32 %v1100, %v1103
        %s1105 = sld [smem:[#allocation8 + $0x10]]
        %v1106 = vstv %s1105
        %v1107 = vmul.f32 %v362, %v1106
        %v1108 = vadd.f32 %v1104, %v1107
        %s1109 = sld [smem:[#allocation8 + $0x11]]
        %v1110 = vstv %s1109
        %v1111 = vmul.f32 %v363, %v1110
        %v1112 = vadd.f32 %v1108, %v1111
        %s1113 = sld [smem:[#allocation8 + $0x12]]
        %v1114 = vstv %s1113
        %v1115 = vmul.f32 %v468, %v1114
        %v1116 = vadd.f32 %v1112, %v1115
        %s1117 = sld [smem:[#allocation8 + $0x13]]
        %v1118 = vstv %s1117
        %v1119 = vmul.f32 %v676, %v1118
        %v1120 = vadd.f32 %v1116, %v1119
        %s1121 = sld [smem:[#allocation8 + $0x14]]
        %v1122 = vstv %s1121
        %v1123 = vmul.f32 %v884, %v1122
        %v1124 = vadd.f32 %v1120, %v1123
        %s1125 = sld [smem:[#allocation8 + $0x15]]
        %v1126 = vstv %s1125
        %v1127 = vmul.f32 %v571, %v1126
        %v1128 = vadd.f32 %v1124, %v1127
        %s1129 = sld [smem:[#allocation8 + $0x16]]
        %v1130 = vstv %s1129
        %v1131 = vmul.f32 %v779, %v1130
        %v1132 = vadd.f32 %v1128, %v1131
        %s1133 = sld [smem:[#allocation8 + $0x17]]
        %v1134 = vstv %s1133
        %v1135 = vmul.f32 %v987, %v1134
        %v1136 = vadd.f32 %v1132, %v1135
        %s1137 = sld [smem:[#allocation8 + $0x18]]
        %v1138 = vstv %s1137
        %v1139 = vmul.f32 %v989, %v1138
        %v1140 = vadd.f32 %v1136, %v1139
        %s1141 = sld [smem:[#allocation8 + $0x19]]
        %v1142 = vstv %s1141
        %v1143 = vmul.f32 %v994, %v1142
        %v1144 = vadd.f32 %v1140, %v1143
        %s1145 = sld [smem:[#allocation8 + $0x1a]]
        %v1146 = vstv %s1145
        %v1147 = vmul.f32 %v999, %v1146
        %v1148 = vadd.f32 %v1144, %v1147
        %s1149 = sld [smem:[#allocation8 + $0x1b]]
        %v1150 = vstv %s1149
        %v1151 = vmul.f32 %v992, %v1150
        %v1152 = vadd.f32 %v1148, %v1151
        %s1153 = sld [smem:[#allocation8 + $0x1c]]
        %v1154 = vstv %s1153
        %v1155 = vmul.f32 %v997, %v1154
        %v1156 = vadd.f32 %v1152, %v1155
        %s1157 = sld [smem:[#allocation8 + $0x1d]]
        %v1158 = vstv %s1157
        %v1159 = vmul.f32 %v1002, %v1158
        %v1160 = vadd.f32 %v1156, %v1159
        %s1161 = scalar_lea.vmem %s308, 2 [#allocation11]
        %1162 = vst [vmem:[%s1161] sm:$0x3] %v1160
        %s1163 = sld [smem:[#allocation7 + $0x8]]
        %v1164 = vstv %s1163
        %v1165 = vmul.f32 %v1003, %v1164
        %s1166 = sld [smem:[#allocation7 + $0x9]]
        %v1167 = vstv %s1166
        %v1168 = vmul.f32 %v1005, %v1167
        %v1169 = vadd.f32 %v1165, %v1168
        %s1170 = sld [smem:[#allocation7 + $0xa]]
        %v1171 = vstv %s1170
        %v1172 = vmul.f32 %v1007, %v1171
        %v1173 = vadd.f32 %v1169, %v1172
        %s1174 = sld [smem:[#allocation7 + $0xb]]
        %v1175 = vstv %s1174
        %v1176 = vmul.f32 %v1009, %v1175
        %v1177 = vadd.f32 %v1173, %v1176
        %s1178 = sld [smem:[#allocation8 + $0x1e]]
        %v1179 = vstv %s1178
        %v1180 = vmul.f32 %v361, %v1179
        %v1181 = vadd.f32 %v1177, %v1180
        %s1182 = sld [smem:[#allocation8 + $0x1f]]
        %v1183 = vstv %s1182
        %v1184 = vmul.f32 %v362, %v1183
        %v1185 = vadd.f32 %v1181, %v1184
        %s1186 = sld [smem:[#allocation8 + $0x20]]
        %v1187 = vstv %s1186
        %v1188 = vmul.f32 %v363, %v1187
        %v1189 = vadd.f32 %v1185, %v1188
        %s1190 = sld [smem:[#allocation8 + $0x21]]
        %v1191 = vstv %s1190
        %v1192 = vmul.f32 %v468, %v1191
        %v1193 = vadd.f32 %v1189, %v1192
        %s1194 = sld [smem:[#allocation8 + $0x22]]
        %v1195 = vstv %s1194
        %v1196 = vmul.f32 %v676, %v1195
        %v1197 = vadd.f32 %v1193, %v1196
        %s1198 = sld [smem:[#allocation8 + $0x23]]
        %v1199 = vstv %s1198
        %v1200 = vmul.f32 %v884, %v1199
        %v1201 = vadd.f32 %v1197, %v1200
        %s1202 = sld [smem:[#allocation8 + $0x24]]
        %v1203 = vstv %s1202
        %v1204 = vmul.f32 %v571, %v1203
        %v1205 = vadd.f32 %v1201, %v1204
        %s1206 = sld [smem:[#allocation8 + $0x25]]
        %v1207 = vstv %s1206
        %v1208 = vmul.f32 %v779, %v1207
        %v1209 = vadd.f32 %v1205, %v1208
        %s1210 = sld [smem:[#allocation8 + $0x26]]
        %v1211 = vstv %s1210
        %v1212 = vmul.f32 %v987, %v1211
        %v1213 = vadd.f32 %v1209, %v1212
        %s1214 = sld [smem:[#allocation8 + $0x27]]
        %v1215 = vstv %s1214
        %v1216 = vmul.f32 %v989, %v1215
        %v1217 = vadd.f32 %v1213, %v1216
        %s1218 = sld [smem:[#allocation8 + $0x28]]
        %v1219 = vstv %s1218
        %v1220 = vmul.f32 %v994, %v1219
        %v1221 = vadd.f32 %v1217, %v1220
        %s1222 = sld [smem:[#allocation8 + $0x29]]
        %v1223 = vstv %s1222
        %v1224 = vmul.f32 %v999, %v1223
        %v1225 = vadd.f32 %v1221, %v1224
        %s1226 = sld [smem:[#allocation8 + $0x2a]]
        %v1227 = vstv %s1226
        %v1228 = vmul.f32 %v992, %v1227
        %v1229 = vadd.f32 %v1225, %v1228
        %s1230 = sld [smem:[#allocation8 + $0x2b]]
        %v1231 = vstv %s1230
        %v1232 = vmul.f32 %v997, %v1231
        %v1233 = vadd.f32 %v1229, %v1232
        %s1234 = sld [smem:[#allocation8 + $0x2c]]
        %v1235 = vstv %s1234
        %v1236 = vmul.f32 %v1002, %v1235
        %v1237 = vadd.f32 %v1233, %v1236
        %s1238 = scalar_lea.vmem %s308, 4 [#allocation11]
        %1239 = vst [vmem:[%s1238] sm:$0x3] %v1237
        %s1240 = sld [smem:[#allocation7 + $0xc]]
        %v1241 = vstv %s1240
        %v1242 = vmul.f32 %v1003, %v1241
        %s1243 = sld [smem:[#allocation7 + $0xd]]
        %v1244 = vstv %s1243
        %v1245 = vmul.f32 %v1005, %v1244
        %v1246 = vadd.f32 %v1242, %v1245
        %s1247 = sld [smem:[#allocation7 + $0xe]]
        %v1248 = vstv %s1247
        %v1249 = vmul.f32 %v1007, %v1248
        %v1250 = vadd.f32 %v1246, %v1249
        %s1251 = sld [smem:[#allocation7 + $0xf]]
        %v1252 = vstv %s1251
        %v1253 = vmul.f32 %v1009, %v1252
        %v1254 = vadd.f32 %v1250, %v1253
        %s1255 = sld [smem:[#allocation8 + $0x2d]]
        %v1256 = vstv %s1255
        %v1257 = vmul.f32 %v361, %v1256
        %v1258 = vadd.f32 %v1254, %v1257
        %s1259 = sld [smem:[#allocation8 + $0x2e]]
        %v1260 = vstv %s1259
        %v1261 = vmul.f32 %v362, %v1260
        %v1262 = vadd.f32 %v1258, %v1261
        %s1263 = sld [smem:[#allocation8 + $0x2f]]
        %v1264 = vstv %s1263
        %v1265 = vmul.f32 %v363, %v1264
        %v1266 = vadd.f32 %v1262, %v1265
        %s1267 = sld [smem:[#allocation8 + $0x30]]
        %v1268 = vstv %s1267
        %v1269 = vmul.f32 %v468, %v1268
        %v1270 = vadd.f32 %v1266, %v1269
        %s1271 = sld [smem:[#allocation8 + $0x31]]
        %v1272 = vstv %s1271
        %v1273 = vmul.f32 %v676, %v1272
        %v1274 = vadd.f32 %v1270, %v1273
        %s1275 = sld [smem:[#allocation8 + $0x32]]
        %v1276 = vstv %s1275
        %v1277 = vmul.f32 %v884, %v1276
        %v1278 = vadd.f32 %v1274, %v1277
        %s1279 = sld [smem:[#allocation8 + $0x33]]
        %v1280 = vstv %s1279
        %v1281 = vmul.f32 %v571, %v1280
        %v1282 = vadd.f32 %v1278, %v1281
        %s1283 = sld [smem:[#allocation8 + $0x34]]
        %v1284 = vstv %s1283
        %v1285 = vmul.f32 %v779, %v1284
        %v1286 = vadd.f32 %v1282, %v1285
        %s1287 = sld [smem:[#allocation8 + $0x35]]
        %v1288 = vstv %s1287
        %v1289 = vmul.f32 %v987, %v1288
        %v1290 = vadd.f32 %v1286, %v1289
        %s1291 = sld [smem:[#allocation8 + $0x36]]
        %v1292 = vstv %s1291
        %v1293 = vmul.f32 %v989, %v1292
        %v1294 = vadd.f32 %v1290, %v1293
        %s1295 = sld [smem:[#allocation8 + $0x37]]
        %v1296 = vstv %s1295
        %v1297 = vmul.f32 %v994, %v1296
        %v1298 = vadd.f32 %v1294, %v1297
        %s1299 = sld [smem:[#allocation8 + $0x38]]
        %v1300 = vstv %s1299
        %v1301 = vmul.f32 %v999, %v1300
        %v1302 = vadd.f32 %v1298, %v1301
        %s1303 = sld [smem:[#allocation8 + $0x39]]
        %v1304 = vstv %s1303
        %v1305 = vmul.f32 %v992, %v1304
        %v1306 = vadd.f32 %v1302, %v1305
        %s1307 = sld [smem:[#allocation8 + $0x3a]]
        %v1308 = vstv %s1307
        %v1309 = vmul.f32 %v997, %v1308
        %v1310 = vadd.f32 %v1306, %v1309
        %s1311 = sld [smem:[#allocation8 + $0x3b]]
        %v1312 = vstv %s1311
        %v1313 = vmul.f32 %v1002, %v1312
        %v1314 = vadd.f32 %v1310, %v1313
        %s1315 = scalar_lea.vmem %s308, 6 [#allocation11]
        %1316 = vst [vmem:[%s1315] sm:$0x3] %v1314
        %s1317 = sand.u32 %s164, 1
        %s1318 = scalar_lea.sflag [#allocation4], %s1317
        %s1319 = sand.u32 %s164, 1
        %s1320 = smul.addr %s1319, 8
        %s1321 = scalar_lea.vmem [#allocation11], %s1320
        // Predicated region
        $region57: #{tpu_custom_call.1} parent=39 // pred_check
          %p1322 = pneg %p174
        $region58: #{tpu_custom_call.1} parent=39 // pred_check_branch
          %1324 = sbr.rel (%p1322) target = $region60
        $region59: #{tpu_custom_call.1} parent=39 // pred_region
          %s1326 = ssub.s32 128, 128
          %1327 = vsyncadd %s1318, %s1326
          %s1328 = smul.addr %s30, 4
          %s1329 = sadd.s32 %s29, %s1328
          %s1330 = smul.addr %s1329, 32
          %s1331 = scalar_lea.hbm %s5, %s1330
          %s1332 = sshll.u32 %s1321, 4
          %s1333 = int_to_ptr.vmem [resolvable:$true] %s1332
          %1338 = dma.vmem_to_hbm [thread:$0]  %s1333, 128, %s1331, %s1318, 32, 32, 2
        $region60: #{tpu_custom_call.1} parent=39 // pred_fallthru
          _
      $region40: #{tpu_custom_call.1} parent=5 // pred_fallthru
        _
      %p1339 = scmp.le.s32.totalorder 2, %s20
      // Predicated region
      $region61: #{tpu_custom_call.1} parent=5 // pred_check
        %p1340 = pneg %p1339
      $region62: #{tpu_custom_call.1} parent=5 // pred_check_branch
        %1342 = sbr.rel (%p1340) target = $region64
      $region63: #{tpu_custom_call.1} parent=5 // pred_region
        %s1343 = ssub.s32 %s20, 2
        // Predicated region
        $region65: #{tpu_custom_call.1} parent=63 // pred_check
          %p1344 = pneg %p180
        $region66: #{tpu_custom_call.1} parent=63 // pred_check_branch
          %1346 = sbr.rel (%p1344) target = $region68
        $region67: #{tpu_custom_call.1} parent=63 // pred_region
          %s1347 = sand.u32 %s165, 1
          %s1348 = scalar_lea.sflag [#allocation4], %s1347
          %s1349 = sand.u32 %s165, 1
          %s1350 = smul.addr %s1349, 8
          %s1351 = scalar_lea.vmem [#allocation11], %s1350
          %1352 = dma.done %s1348, 128
        $region68: #{tpu_custom_call.1} parent=63 // pred_fallthru
          _
      $region64: #{tpu_custom_call.1} parent=5 // pred_fallthru
        _
    $region6: #{tpu_custom_call.1} parent=1 // loop_footer
      %s24 = sadd.s32 1, %s20
    $region7: #{tpu_custom_call.1} parent=1 // loop_footer_branch
      %19 = sbr.rel target = $region3
    $region8: #{tpu_custom_call.1} parent=1 // loop_exit
      _
    %1353 = vsyncpa [#allocation3], 1
    %s1354 = scalar_lea.sflag [#allocation3], 1
    %1355 = vsyncpa %s1354, 1
    %1356 = vsyncpa [#allocation4], 1
    %s1357 = scalar_lea.sflag [#allocation4], 1
    %1358 = vsyncpa %s1357, 1
    %1359 = vsyncpa [#allocation5], 1
    %s1360 = scalar_lea.sflag [#allocation5], 1
    %1361 = vsyncpa %s1360, 1
    %1362 = vsyncpa [#allocation9], 1
    %1363 = vsyncpa [#allocation6], 1
    %s1364 = scalar_lea.sflag [#allocation6], 1
    %1365 = vsyncpa %s1364, 1

</llo_original>
